<compile_context>
chip_gen: v7x
topology: tpu7x:2x2x1
jax: 0.10.0
libtpu: 0.0.40
codegen_flags: <defaults>
</compile_context>

<pallas_src>
import jax
import jax.numpy as jnp
from jax import lax
from jax.experimental import pallas as pl
from jax.experimental.pallas import tpu as pltpu


def _mlp_kernel(x_ref, w1_ref, b1_ref, w2_ref, b2_ref, w3t_ref, b3t_ref, o_ref):
    # x_ref:   (TB, F)  caller dtype (f32 here) -> cast to bf16 in-register
    # w1_ref:  (F, 32)  bf16    b1_ref:  (1, 32) f32
    # w2_ref:  (32, 32) bf16    b2_ref:  (1, 32) f32
    # w3t_ref: (C, 32)  bf16    b3t_ref: (C, 1)  f32
    # o_ref:   (C, TB)  f32  (lane-dense output block)
    x = x_ref[...].astype(jnp.bfloat16)

    h1 = jnp.dot(x, w1_ref[...], preferred_element_type=jnp.float32) + b1_ref[...]
    h1 = jnp.maximum(h1, 0.0)

    h2 = jnp.dot(h1.astype(jnp.bfloat16), w2_ref[...],
                 preferred_element_type=jnp.float32) + b2_ref[...]
    h2 = jnp.maximum(h2, 0.0)

    # Last matmul in transposed (NT) form: w3^T (.) h2^T -> (C, TB), contracting
    # the last dim of both operands (same contraction pl.dot(trans_b=True)
    # uses), so the result is already lane-dense and stores are unmasked vst.
    logits_t = lax.dot_general(
        w3t_ref[...], h2.astype(jnp.bfloat16),
        dimension_numbers=(((1,), (1,)), ((), ())),
        preferred_element_type=jnp.float32) + b3t_ref[...]

    # sigmoid(z) = 0.5 * tanh(0.5 z) + 0.5 : exact, single EUP push.
    o_ref[...] = (0.5 * jnp.tanh(0.5 * logits_t) + 0.5).astype(o_ref.dtype)


def _choose_batch_tile(B, F, C, x_bytes, out_bytes=4,
                       min_step_bytes=1 << 20,
                       small_problem_bytes=2 << 20,
                       vmem_budget=12 << 20):
    """Pick the batch tile by bytes-per-grid-step, not a fixed cap.

    * Small problems (x <= ~2 MiB) -> one full-array block (no pipeline to pay).
    * Otherwise: largest power-of-two multiple of 128 dividing B such that each
      step moves >= ~1 MiB of x and 2x(x block) + 2x(out block) fits a 12 MiB
      VMEM budget (safe under v5e 16 MiB scoped / v6e 32 MiB / v7x 32-of-64),
      preferring tiles that leave >= 4 grid steps (>= 2 per v7x TensorCore).
    """
    x_row = F * x_bytes
    out_row = C * out_bytes
    if B * x_row <= small_problem_bytes:
        return B
    cands = [128 << k for k in range(24)
             if (128 << k) <= B and B % (128 << k) == 0]
    # TODO(synk): pad/mask ragged batches that no lane-aligned tile divides.
    if not cands:
        return B
    fits = [t for t in cands if 2 * t * (x_row + out_row) <= vmem_budget]
    if not fits:
        return cands[0]
    big = [t for t in fits if t * x_row >= min_step_bytes]
    pool = big if big else fits
    multi = [t for t in pool if B // t >= 4]
    return max(multi) if multi else max(pool)


def _weight_spec(shape, single_buffered):
    # Constant index map: same block every grid step -> DMA'd once, resident in
    # VMEM. Buffered(1) drops the useless second pipeline buffer.
    if single_buffered:
        return pl.BlockSpec(shape, lambda i: (0, 0), pipeline_mode=pl.Buffered(1))
    return pl.BlockSpec(shape, lambda i: (0, 0))


def cdk_classifier_forward(x, params, *, batch_tile=None):
    """x: (B, F) array. params: dict of w1,b1,w2,b2,w3,b3 (f32, (in,out) weights).
    Returns sigmoid(relu(relu(x@w1+b1)@w2+b2)@w3+b3), shape (B, C), float32."""
    B, F = x.shape
    C = params["w3"].shape[1]
    if batch_tile is None:
        batch_tile = _choose_batch_tile(B, F, C, x.dtype.itemsize)
    assert B % batch_tile == 0, "batch must be divisible by batch_tile"
    # x block (batch_tile, F): batch_tile % 8 == 0 or == B.
    # out block (C, batch_tile): lane dim must be a multiple of 128 or == B.
    assert batch_tile == B or batch_tile % 128 == 0, \
        "batch_tile must be a multiple of 128 (or equal to B)"

    grid = (B // batch_tile,)

    # Tiny weights: ship as bf16 (MXU-native). Biases stay f32 for the f32
    # epilogue. w3/b3 are pre-transposed so the last matmul directly produces
    # the lane-dense (C, batch_tile) output block.
    w1 = params["w1"].astype(jnp.bfloat16)
    w2 = params["w2"].astype(jnp.bfloat16)
    w3t = params["w3"].T.astype(jnp.bfloat16)   # (C, 32)
    b1, b2 = params["b1"], params["b2"]          # (1, 32) f32
    b3t = params["b3"].T                         # (C, 1)  f32

    def call(single_buffered_weights):
        return pl.pallas_call(
            _mlp_kernel,
            out_shape=jax.ShapeDtypeStruct((C, B), jnp.float32),
            grid_spec=pltpu.PrefetchScalarGridSpec(
                num_scalar_prefetch=0,
                grid=grid,
                in_specs=[
                    pl.BlockSpec((batch_tile, F), lambda i: (i, 0)),
                    _weight_spec(w1.shape, single_buffered_weights),
                    _weight_spec(b1.shape, single_buffered_weights),
                    _weight_spec(w2.shape, single_buffered_weights),
                    _weight_spec(b2.shape, single_buffered_weights),
                    _weight_spec(w3t.shape, single_buffered_weights),
                    _weight_spec(b3t.shape, single_buffered_weights),
                ],
                out_specs=pl.BlockSpec((C, batch_tile), lambda i: (0, i)),
            ),
            compiler_params=pltpu.CompilerParams(
                # Batch steps are independent -> shard across v7x's 2 TCs;
                # measured no-op (harmless) on single-TC v5e/v6e.
                dimension_semantics=("parallel",)),
        )(x, w1, b1, w2, b2, w3t, b3t)

    try:
        out_t = call(single_buffered_weights=True)
    except Exception:
        # Fallback for jax builds without BlockSpec(pipeline_mode=...).
        out_t = call(single_buffered_weights=False)

    # Kernel-native layout is (C, B) (lane-dense stores); module API is (B, C).
    # C is tiny, so this wrapper transpose is negligible next to the x stream.
    return out_t.T


def init_params(key, feature, num_classes=2):
    """Deterministic init mimicking nn.Linear defaults (uniform +/- 1/sqrt(fan_in)).
    Weights stored as (in_features, out_features) so the forward is x @ W + b."""
    ks = jax.random.split(key, 6)

    def linear(kw, kb, fan_in, fan_out):
        bound = 1.0 / jnp.sqrt(jnp.float32(fan_in))
        w = jax.random.uniform(kw, (fan_in, fan_out), jnp.float32, -bound, bound)
        b = jax.random.uniform(kb, (1, fan_out), jnp.float32, -bound, bound)
        return w, b

    w1, b1 = linear(ks[0], ks[1], feature, 32)
    w2, b2 = linear(ks[2], ks[3], 32, 32)
    w3, b3 = linear(ks[4], ks[5], 32, num_classes)
    return {"w1": w1, "b1": b1, "w2": w2, "b2": b2, "w3": w3, "b3": b3}


def reference_forward(x, p):
    h1 = jnp.maximum(x @ p["w1"] + p["b1"], 0.0)
    h2 = jnp.maximum(h1 @ p["w2"] + p["b2"], 0.0)
    return jax.nn.sigmoid(h2 @ p["w3"] + p["b3"])


if __name__ == "__main__":
    key = jax.random.PRNGKey(0)
    k_x, k_p = jax.random.split(key)

    # Small demo: B=512, F=16 -> ~32 KB of x -> single full-array block,
    # grid=(1,) (no pointless pipeline for a few-KB DMA).
    batch, feature, num_classes = 512, 16, 2
    x = jax.random.normal(k_x, (batch, feature), jnp.float32)
    params = init_params(k_p, feature, num_classes)

    out = cdk_classifier_forward(x, params)
    out = jax.block_until_ready(out)

    ref = reference_forward(x, params)
    assert out.shape == (batch, num_classes)
    # bf16 MXU operands -> ~1e-2 level deviation vs the pure-f32 reference.
    assert jnp.allclose(out, ref, atol=2e-2, rtol=2e-2), "mismatch vs reference"

    print("KERNEL_OK")
</pallas_src>

<mosaic_0001>
module attributes {stable_mosaic.version = 11 : i64} {
  func.func @_mlp_kernel(%arg0: i32, %arg1: memref<512x16xf32, #tpu.memory_space<vmem>>, %arg2: memref<16x32xbf16, #tpu.memory_space<vmem>>, %arg3: memref<1x32xf32, #tpu.memory_space<vmem>>, %arg4: memref<32x32xbf16, #tpu.memory_space<vmem>>, %arg5: memref<1x32xf32, #tpu.memory_space<vmem>>, %arg6: memref<2x32xbf16, #tpu.memory_space<vmem>>, %arg7: memref<2x1xf32, #tpu.memory_space<vmem>>, %arg8: memref<2x512xf32, #tpu.memory_space<vmem>>) attributes {dimension_semantics = [#tpu.dimension_semantics<parallel>], iteration_bounds = array<i64: 1>, scalar_prefetch = 0 : i64, scratch_operands = 0 : i64, tpu.core_type = #tpu.core_type<tc>, window_params = [{transform_indices = @transform_0, window_bounds = array<i64: 512, 16>}, {pipeline_mode = #tpu.pipeline_mode<synchronous>, transform_indices = @transform_1, window_bounds = array<i64: 16, 32>}, {pipeline_mode = #tpu.pipeline_mode<synchronous>, transform_indices = @transform_2, window_bounds = array<i64: 1, 32>}, {pipeline_mode = #tpu.pipeline_mode<synchronous>, transform_indices = @transform_3, window_bounds = array<i64: 32, 32>}, {pipeline_mode = #tpu.pipeline_mode<synchronous>, transform_indices = @transform_4, window_bounds = array<i64: 1, 32>}, {pipeline_mode = #tpu.pipeline_mode<synchronous>, transform_indices = @transform_5, window_bounds = array<i64: 2, 32>}, {pipeline_mode = #tpu.pipeline_mode<synchronous>, transform_indices = @transform_6, window_bounds = array<i64: 2, 1>}, {transform_indices = @transform_7, window_bounds = array<i64: 2, 512>}]} {
    %c0 = arith.constant 0 : index
    %c0_0 = arith.constant 0 : index
    %0 = vector.load %arg1[%c0, %c0_0] : memref<512x16xf32, #tpu.memory_space<vmem>>, vector<512x16xf32>
    %1 = arith.truncf %0 : vector<512x16xf32> to vector<512x16xbf16>
    %c0_1 = arith.constant 0 : index
    %c0_2 = arith.constant 0 : index
    %2 = vector.load %arg2[%c0_1, %c0_2] : memref<16x32xbf16, #tpu.memory_space<vmem>>, vector<16x32xbf16>
    %cst = arith.constant dense<0.000000e+00> : vector<512x32xf32>
    %3 = tpu.matmul %1, %2, %cst {dimension_numbers = #tpu.dot_dimension_numbers<[1], [0], [0], [1], [0, 0, 1, 1], [], []>} : vector<512x16xbf16>, vector<16x32xbf16>, vector<512x32xf32> -> vector<512x32xf32>
    %c0_3 = arith.constant 0 : index
    %c0_4 = arith.constant 0 : index
    %4 = vector.load %arg3[%c0_3, %c0_4] : memref<1x32xf32, #tpu.memory_space<vmem>>, vector<1x32xf32>
    %5 = vector.broadcast %4 : vector<1x32xf32> to vector<512x32xf32>
    %6 = arith.addf %3, %5 : vector<512x32xf32>
    %cst_5 = arith.constant 0.000000e+00 : f32
    %7 = vector.broadcast %cst_5 : f32 to vector<512x32xf32>
    %8 = arith.maximumf %6, %7 : vector<512x32xf32>
    %9 = arith.truncf %8 : vector<512x32xf32> to vector<512x32xbf16>
    %c0_6 = arith.constant 0 : index
    %c0_7 = arith.constant 0 : index
    %10 = vector.load %arg4[%c0_6, %c0_7] : memref<32x32xbf16, #tpu.memory_space<vmem>>, vector<32x32xbf16>
    %cst_8 = arith.constant dense<0.000000e+00> : vector<512x32xf32>
    %11 = tpu.matmul %9, %10, %cst_8 {dimension_numbers = #tpu.dot_dimension_numbers<[1], [0], [0], [1], [0, 0, 1, 1], [], []>} : vector<512x32xbf16>, vector<32x32xbf16>, vector<512x32xf32> -> vector<512x32xf32>
    %c0_9 = arith.constant 0 : index
    %c0_10 = arith.constant 0 : index
    %12 = vector.load %arg5[%c0_9, %c0_10] : memref<1x32xf32, #tpu.memory_space<vmem>>, vector<1x32xf32>
    %13 = vector.broadcast %12 : vector<1x32xf32> to vector<512x32xf32>
    %14 = arith.addf %11, %13 : vector<512x32xf32>
    %cst_11 = arith.constant 0.000000e+00 : f32
    %15 = vector.broadcast %cst_11 : f32 to vector<512x32xf32>
    %16 = arith.maximumf %14, %15 : vector<512x32xf32>
    %c0_12 = arith.constant 0 : index
    %c0_13 = arith.constant 0 : index
    %17 = vector.load %arg6[%c0_12, %c0_13] : memref<2x32xbf16, #tpu.memory_space<vmem>>, vector<2x32xbf16>
    %18 = arith.truncf %16 : vector<512x32xf32> to vector<512x32xbf16>
    %cst_14 = arith.constant dense<0.000000e+00> : vector<2x512xf32>
    %19 = tpu.matmul %17, %18, %cst_14 {dimension_numbers = #tpu.dot_dimension_numbers<[1], [1], [0], [0], [0, 0, 1, 0], [], []>} : vector<2x32xbf16>, vector<512x32xbf16>, vector<2x512xf32> -> vector<2x512xf32>
    %c0_15 = arith.constant 0 : index
    %c0_16 = arith.constant 0 : index
    %20 = vector.load %arg7[%c0_15, %c0_16] : memref<2x1xf32, #tpu.memory_space<vmem>>, vector<2x1xf32>
    %21 = vector.broadcast %20 : vector<2x1xf32> to vector<2x512xf32>
    %22 = arith.addf %19, %21 : vector<2x512xf32>
    %cst_17 = arith.constant 5.000000e-01 : f32
    %23 = vector.broadcast %cst_17 : f32 to vector<2x512xf32>
    %24 = arith.mulf %23, %22 : vector<2x512xf32>
    %25 = math.tanh %24 : vector<2x512xf32>
    %cst_18 = arith.constant 5.000000e-01 : f32
    %26 = vector.broadcast %cst_18 : f32 to vector<2x512xf32>
    %27 = arith.mulf %26, %25 : vector<2x512xf32>
    %cst_19 = arith.constant 5.000000e-01 : f32
    %28 = vector.broadcast %cst_19 : f32 to vector<2x512xf32>
    %29 = arith.addf %27, %28 : vector<2x512xf32>
    %c0_20 = arith.constant 0 : index
    %c0_21 = arith.constant 0 : index
    %30 = vector.load %arg8[%c0_20, %c0_21] : memref<2x512xf32, #tpu.memory_space<vmem>>, vector<2x512xf32>
    tpu.vector_store %arg8[%c0_20, %c0_21], %29 {strides = array<i32>} : memref<2x512xf32, #tpu.memory_space<vmem>>, vector<2x512xf32>,
    return
  }
  func.func @transform_0(%arg0: i32) -> (i32, i32) {
    %c0_i32 = arith.constant 0 : i32
    %c0_i32_0 = arith.constant 0 : i32
    return %arg0, %c0_i32 : i32, i32
  }
  func.func @transform_1(%arg0: i32) -> (i32, i32) {
    %c0_i32 = arith.constant 0 : i32
    %c0_i32_0 = arith.constant 0 : i32
    %c0_i32_1 = arith.constant 0 : i32
    return %c0_i32, %c0_i32_0 : i32, i32
  }
  func.func @transform_2(%arg0: i32) -> (i32, i32) {
    %c0_i32 = arith.constant 0 : i32
    %c0_i32_0 = arith.constant 0 : i32
    %c0_i32_1 = arith.constant 0 : i32
    return %c0_i32, %c0_i32_0 : i32, i32
  }
  func.func @transform_3(%arg0: i32) -> (i32, i32) {
    %c0_i32 = arith.constant 0 : i32
    %c0_i32_0 = arith.constant 0 : i32
    %c0_i32_1 = arith.constant 0 : i32
    return %c0_i32, %c0_i32_0 : i32, i32
  }
  func.func @transform_4(%arg0: i32) -> (i32, i32) {
    %c0_i32 = arith.constant 0 : i32
    %c0_i32_0 = arith.constant 0 : i32
    %c0_i32_1 = arith.constant 0 : i32
    return %c0_i32, %c0_i32_0 : i32, i32
  }
  func.func @transform_5(%arg0: i32) -> (i32, i32) {
    %c0_i32 = arith.constant 0 : i32
    %c0_i32_0 = arith.constant 0 : i32
    %c0_i32_1 = arith.constant 0 : i32
    return %c0_i32, %c0_i32_0 : i32, i32
  }
  func.func @transform_6(%arg0: i32) -> (i32, i32) {
    %c0_i32 = arith.constant 0 : i32
    %c0_i32_0 = arith.constant 0 : i32
    %c0_i32_1 = arith.constant 0 : i32
    return %c0_i32, %c0_i32_0 : i32, i32
  }
  func.func @transform_7(%arg0: i32) -> (i32, i32) {
    %c0_i32 = arith.constant 0 : i32
    %c0_i32_0 = arith.constant 0 : i32
    return %c0_i32, %arg0 : i32, i32
  }
}

module attributes {stable_mosaic.version = 11 : i64} {
  func.func @_mlp_kernel(%arg0: i32, %arg1: memref<512x16xf32, #tpu.memory_space<vmem>>, %arg2: memref<16x32xbf16, #tpu.memory_space<vmem>>, %arg3: memref<1x32xf32, #tpu.memory_space<vmem>>, %arg4: memref<32x32xbf16, #tpu.memory_space<vmem>>, %arg5: memref<1x32xf32, #tpu.memory_space<vmem>>, %arg6: memref<2x32xbf16, #tpu.memory_space<vmem>>, %arg7: memref<2x1xf32, #tpu.memory_space<vmem>>, %arg8: memref<2x512xf32, #tpu.memory_space<vmem>>) attributes {dimension_semantics = [#tpu.dimension_semantics<parallel>], iteration_bounds = array<i64: 1>, scalar_prefetch = 0 : i64, scratch_operands = 0 : i64, tpu.core_type = #tpu.core_type<tc>, window_params = [{transform_indices = @transform_0, window_bounds = array<i64: 512, 16>}, {pipeline_mode = #tpu.pipeline_mode<synchronous>, transform_indices = @transform_1, window_bounds = array<i64: 16, 32>}, {pipeline_mode = #tpu.pipeline_mode<synchronous>, transform_indices = @transform_2, window_bounds = array<i64: 1, 32>}, {pipeline_mode = #tpu.pipeline_mode<synchronous>, transform_indices = @transform_3, window_bounds = array<i64: 32, 32>}, {pipeline_mode = #tpu.pipeline_mode<synchronous>, transform_indices = @transform_4, window_bounds = array<i64: 1, 32>}, {pipeline_mode = #tpu.pipeline_mode<synchronous>, transform_indices = @transform_5, window_bounds = array<i64: 2, 32>}, {pipeline_mode = #tpu.pipeline_mode<synchronous>, transform_indices = @transform_6, window_bounds = array<i64: 2, 1>}, {transform_indices = @transform_7, window_bounds = array<i64: 2, 512>}]} {
    %c0 = arith.constant 0 : index
    %c0_0 = arith.constant 0 : index
    %0 = vector.load %arg1[%c0, %c0_0] : memref<512x16xf32, #tpu.memory_space<vmem>>, vector<512x16xf32>
    %1 = arith.truncf %0 : vector<512x16xf32> to vector<512x16xbf16>
    %c0_1 = arith.constant 0 : index
    %c0_2 = arith.constant 0 : index
    %2 = vector.load %arg2[%c0_1, %c0_2] : memref<16x32xbf16, #tpu.memory_space<vmem>>, vector<16x32xbf16>
    %cst = arith.constant dense<0.000000e+00> : vector<512x32xf32>
    %3 = tpu.matmul %1, %2, %cst {dimension_numbers = #tpu.dot_dimension_numbers<[1], [0], [0], [1], [0, 0, 1, 1], [], []>} : vector<512x16xbf16>, vector<16x32xbf16>, vector<512x32xf32> -> vector<512x32xf32>
    %c0_3 = arith.constant 0 : index
    %c0_4 = arith.constant 0 : index
    %4 = vector.load %arg3[%c0_3, %c0_4] : memref<1x32xf32, #tpu.memory_space<vmem>>, vector<1x32xf32>
    %5 = vector.broadcast %4 : vector<1x32xf32> to vector<512x32xf32>
    %6 = arith.addf %3, %5 : vector<512x32xf32>
    %cst_5 = arith.constant 0.000000e+00 : f32
    %7 = vector.broadcast %cst_5 : f32 to vector<512x32xf32>
    %8 = arith.maximumf %6, %7 : vector<512x32xf32>
    %9 = arith.truncf %8 : vector<512x32xf32> to vector<512x32xbf16>
    %c0_6 = arith.constant 0 : index
    %c0_7 = arith.constant 0 : index
    %10 = vector.load %arg4[%c0_6, %c0_7] : memref<32x32xbf16, #tpu.memory_space<vmem>>, vector<32x32xbf16>
    %cst_8 = arith.constant dense<0.000000e+00> : vector<512x32xf32>
    %11 = tpu.matmul %9, %10, %cst_8 {dimension_numbers = #tpu.dot_dimension_numbers<[1], [0], [0], [1], [0, 0, 1, 1], [], []>} : vector<512x32xbf16>, vector<32x32xbf16>, vector<512x32xf32> -> vector<512x32xf32>
    %c0_9 = arith.constant 0 : index
    %c0_10 = arith.constant 0 : index
    %12 = vector.load %arg5[%c0_9, %c0_10] : memref<1x32xf32, #tpu.memory_space<vmem>>, vector<1x32xf32>
    %13 = vector.broadcast %12 : vector<1x32xf32> to vector<512x32xf32>
    %14 = arith.addf %11, %13 : vector<512x32xf32>
    %cst_11 = arith.constant 0.000000e+00 : f32
    %15 = vector.broadcast %cst_11 : f32 to vector<512x32xf32>
    %16 = arith.maximumf %14, %15 : vector<512x32xf32>
    %c0_12 = arith.constant 0 : index
    %c0_13 = arith.constant 0 : index
    %17 = vector.load %arg6[%c0_12, %c0_13] : memref<2x32xbf16, #tpu.memory_space<vmem>>, vector<2x32xbf16>
    %18 = arith.truncf %16 : vector<512x32xf32> to vector<512x32xbf16>
    %cst_14 = arith.constant dense<0.000000e+00> : vector<2x512xf32>
    %19 = tpu.matmul %17, %18, %cst_14 {dimension_numbers = #tpu.dot_dimension_numbers<[1], [1], [0], [0], [0, 0, 1, 0], [], []>} : vector<2x32xbf16>, vector<512x32xbf16>, vector<2x512xf32> -> vector<2x512xf32>
    %c0_15 = arith.constant 0 : index
    %c0_16 = arith.constant 0 : index
    %20 = vector.load %arg7[%c0_15, %c0_16] : memref<2x1xf32, #tpu.memory_space<vmem>>, vector<2x1xf32>
    %21 = vector.broadcast %20 : vector<2x1xf32> to vector<2x512xf32>
    %22 = arith.addf %19, %21 : vector<2x512xf32>
    %cst_17 = arith.constant 5.000000e-01 : f32
    %23 = vector.broadcast %cst_17 : f32 to vector<2x512xf32>
    %24 = arith.mulf %23, %22 : vector<2x512xf32>
    %25 = math.tanh %24 : vector<2x512xf32>
    %cst_18 = arith.constant 5.000000e-01 : f32
    %26 = vector.broadcast %cst_18 : f32 to vector<2x512xf32>
    %27 = arith.mulf %26, %25 : vector<2x512xf32>
    %cst_19 = arith.constant 5.000000e-01 : f32
    %28 = vector.broadcast %cst_19 : f32 to vector<2x512xf32>
    %29 = arith.addf %27, %28 : vector<2x512xf32>
    %c0_20 = arith.constant 0 : index
    %c0_21 = arith.constant 0 : index
    %30 = vector.load %arg8[%c0_20, %c0_21] : memref<2x512xf32, #tpu.memory_space<vmem>>, vector<2x512xf32>
    tpu.vector_store %arg8[%c0_20, %c0_21], %29 {strides = array<i32>} : memref<2x512xf32, #tpu.memory_space<vmem>>, vector<2x512xf32>,
    return
  }
  func.func @transform_0(%arg0: i32) -> (i32, i32) {
    %c0_i32 = arith.constant 0 : i32
    %c0_i32_0 = arith.constant 0 : i32
    return %arg0, %c0_i32 : i32, i32
  }
  func.func @transform_1(%arg0: i32) -> (i32, i32) {
    %c0_i32 = arith.constant 0 : i32
    %c0_i32_0 = arith.constant 0 : i32
    %c0_i32_1 = arith.constant 0 : i32
    return %c0_i32, %c0_i32_0 : i32, i32
  }
  func.func @transform_2(%arg0: i32) -> (i32, i32) {
    %c0_i32 = arith.constant 0 : i32
    %c0_i32_0 = arith.constant 0 : i32
    %c0_i32_1 = arith.constant 0 : i32
    return %c0_i32, %c0_i32_0 : i32, i32
  }
  func.func @transform_3(%arg0: i32) -> (i32, i32) {
    %c0_i32 = arith.constant 0 : i32
    %c0_i32_0 = arith.constant 0 : i32
    %c0_i32_1 = arith.constant 0 : i32
    return %c0_i32, %c0_i32_0 : i32, i32
  }
  func.func @transform_4(%arg0: i32) -> (i32, i32) {
    %c0_i32 = arith.constant 0 : i32
    %c0_i32_0 = arith.constant 0 : i32
    %c0_i32_1 = arith.constant 0 : i32
    return %c0_i32, %c0_i32_0 : i32, i32
  }
  func.func @transform_5(%arg0: i32) -> (i32, i32) {
    %c0_i32 = arith.constant 0 : i32
    %c0_i32_0 = arith.constant 0 : i32
    %c0_i32_1 = arith.constant 0 : i32
    return %c0_i32, %c0_i32_0 : i32, i32
  }
  func.func @transform_6(%arg0: i32) -> (i32, i32) {
    %c0_i32 = arith.constant 0 : i32
    %c0_i32_0 = arith.constant 0 : i32
    %c0_i32_1 = arith.constant 0 : i32
    return %c0_i32, %c0_i32_0 : i32, i32
  }
  func.func @transform_7(%arg0: i32) -> (i32, i32) {
    %c0_i32 = arith.constant 0 : i32
    %c0_i32_0 = arith.constant 0 : i32
    return %c0_i32, %arg0 : i32, i32
  }
}

</mosaic_0001>

<llo_original>
// kernel: tpu_custom_call.1
$region0: #{tpu_custom_call.1}
  #allocation0 [shape = 'u32[]', space=smem, size = 0x4, offset = 0x4, fixed_abs, tag = 'smem constant byte address 0x4 - core index']
  #allocation1 [shape = 'u32[144,128]{1,0:T(1,128)}', space=vmem, size = 0x12000, scoped, tag = 'internal scratch']
  %s0 = inlined_call_operand.vmem [shape: f32[512,16], index: 0, kind: input, shape index: {}]
  %s1 = inlined_call_operand.vmem [shape: bf16[16,32], index: 1, kind: input, shape index: {}]
  %s2 = inlined_call_operand.vmem [shape: f32[1,32], index: 2, kind: input, shape index: {}]
  %s3 = inlined_call_operand.vmem [shape: bf16[32,32], index: 3, kind: input, shape index: {}]
  %s4 = inlined_call_operand.vmem [shape: f32[1,32], index: 4, kind: input, shape index: {}]
  %s5 = inlined_call_operand.vmem [shape: bf16[2,32], index: 5, kind: input, shape index: {}]
  %s6 = inlined_call_operand.vmem [shape: f32[2,1], index: 6, kind: input, shape index: {}]
  %s7 = inlined_call_operand.hbm [shape: f32[2,512], index: 7, kind: output, shape index: {}]
  %s8 = sld [smem:[#allocation0]]
  $region38: #{tpu_custom_call.1} parent=0
    _
  %s10 = ssub.s32 1, %s8
  %s11 = scalar_select 0, %s10, %s8
  $region1: #{tpu_custom_call.1} parent=0
    #allocation2 [shape = 'u8[4096]{0}', space=vmem, size = 0x1000, scoped, tag = 'output window, operand 0, single buffered']
    #allocation3 [shape = 's32[1]{0}', space=sflag, size = 0x4, scoped, tag = 'scoped memory for tpu_custom_call.1']
    %12 = vsyncpa [#allocation3], 0
    // Predicated region
    $region2: #{tpu_custom_call.1} parent=1 // pred_check
      _
    $region3: #{tpu_custom_call.1} parent=1 // pred_check_branch
      %14 = sbr.rel (0) target = $region5
    $region4: #{tpu_custom_call.1} parent=1 // pred_region
      _
    $region5: #{tpu_custom_call.1} parent=1 // pred_fallthru
      _
    // Predicated region
    $region6: #{tpu_custom_call.1} parent=1 // pred_check
      _
    $region7: #{tpu_custom_call.1} parent=1 // pred_check_branch
      %16 = sbr.rel (0) target = $region9
    $region8: #{tpu_custom_call.1} parent=1 // pred_region
      _
    $region9: #{tpu_custom_call.1} parent=1 // pred_fallthru
      _
    // Predicated region
    $region10: #{tpu_custom_call.1} parent=1 // pred_check
      _
    $region11: #{tpu_custom_call.1} parent=1 // pred_check_branch
      %18 = sbr.rel (0) target = $region13
    $region12: #{tpu_custom_call.1} parent=1 // pred_region
      _
    $region13: #{tpu_custom_call.1} parent=1 // pred_fallthru
      _
    // Predicated region
    $region14: #{tpu_custom_call.1} parent=1 // pred_check
      _
    $region15: #{tpu_custom_call.1} parent=1 // pred_check_branch
      %20 = sbr.rel (0) target = $region17
    $region16: #{tpu_custom_call.1} parent=1 // pred_region
      _
    $region17: #{tpu_custom_call.1} parent=1 // pred_fallthru
      _
    // Predicated region
    $region18: #{tpu_custom_call.1} parent=1 // pred_check
      _
    $region19: #{tpu_custom_call.1} parent=1 // pred_check_branch
      %22 = sbr.rel (0) target = $region21
    $region20: #{tpu_custom_call.1} parent=1 // pred_region
      _
    $region21: #{tpu_custom_call.1} parent=1 // pred_fallthru
      _
    // Predicated region
    $region22: #{tpu_custom_call.1} parent=1 // pred_check
      _
    $region23: #{tpu_custom_call.1} parent=1 // pred_check_branch
      %24 = sbr.rel (0) target = $region25
    $region24: #{tpu_custom_call.1} parent=1 // pred_region
      _
    $region25: #{tpu_custom_call.1} parent=1 // pred_fallthru
      _
    // Predicated region
    $region26: #{tpu_custom_call.1} parent=1 // pred_check
      _
    $region27: #{tpu_custom_call.1} parent=1 // pred_check_branch
      %26 = sbr.rel (0) target = $region29
    $region28: #{tpu_custom_call.1} parent=1 // pred_region
      _
    $region29: #{tpu_custom_call.1} parent=1 // pred_fallthru
      _
    %v28 = vld [vmem:[%s0] sm:$0xff]
    %v29 = vld [vmem:[%s0 + $0x8] sm:$0xff]
    %v30 = vld [vmem:[%s0 + $0x10] sm:$0xff]
    %v31 = vld [vmem:[%s0 + $0x18] sm:$0xff]
    %v32 = vld [vmem:[%s0 + $0x20] sm:$0xff]
    %v33 = vld [vmem:[%s0 + $0x28] sm:$0xff]
    %v34 = vld [vmem:[%s0 + $0x30] sm:$0xff]
    %v35 = vld [vmem:[%s0 + $0x38] sm:$0xff]
    %v36 = vld [vmem:[%s0 + $0x40] sm:$0xff]
    %v37 = vld [vmem:[%s0 + $0x48] sm:$0xff]
    %v38 = vld [vmem:[%s0 + $0x50] sm:$0xff]
    %v39 = vld [vmem:[%s0 + $0x58] sm:$0xff]
    %v40 = vld [vmem:[%s0 + $0x60] sm:$0xff]
    %v41 = vld [vmem:[%s0 + $0x68] sm:$0xff]
    %v42 = vld [vmem:[%s0 + $0x70] sm:$0xff]
    %v43 = vld [vmem:[%s0 + $0x78] sm:$0xff]
    %v44 = vld [vmem:[%s0 + $0x80] sm:$0xff]
    %v45 = vld [vmem:[%s0 + $0x88] sm:$0xff]
    %v46 = vld [vmem:[%s0 + $0x90] sm:$0xff]
    %v47 = vld [vmem:[%s0 + $0x98] sm:$0xff]
    %v48 = vld [vmem:[%s0 + $0xa0] sm:$0xff]
    %v49 = vld [vmem:[%s0 + $0xa8] sm:$0xff]
    %v50 = vld [vmem:[%s0 + $0xb0] sm:$0xff]
    %v51 = vld [vmem:[%s0 + $0xb8] sm:$0xff]
    %v52 = vld [vmem:[%s0 + $0xc0] sm:$0xff]
    %v53 = vld [vmem:[%s0 + $0xc8] sm:$0xff]
    %v54 = vld [vmem:[%s0 + $0xd0] sm:$0xff]
    %v55 = vld [vmem:[%s0 + $0xd8] sm:$0xff]
    %v56 = vld [vmem:[%s0 + $0xe0] sm:$0xff]
    %v57 = vld [vmem:[%s0 + $0xe8] sm:$0xff]
    %v58 = vld [vmem:[%s0 + $0xf0] sm:$0xff]
    %v59 = vld [vmem:[%s0 + $0xf8] sm:$0xff]
    %v60 = vld [vmem:[%s0 + $0x100] sm:$0xff]
    %v61 = vld [vmem:[%s0 + $0x108] sm:$0xff]
    %v62 = vld [vmem:[%s0 + $0x110] sm:$0xff]
    %v63 = vld [vmem:[%s0 + $0x118] sm:$0xff]
    %v64 = vld [vmem:[%s0 + $0x120] sm:$0xff]
    %v65 = vld [vmem:[%s0 + $0x128] sm:$0xff]
    %v66 = vld [vmem:[%s0 + $0x130] sm:$0xff]
    %v67 = vld [vmem:[%s0 + $0x138] sm:$0xff]
    %v68 = vld [vmem:[%s0 + $0x140] sm:$0xff]
    %v69 = vld [vmem:[%s0 + $0x148] sm:$0xff]
    %v70 = vld [vmem:[%s0 + $0x150] sm:$0xff]
    %v71 = vld [vmem:[%s0 + $0x158] sm:$0xff]
    %v72 = vld [vmem:[%s0 + $0x160] sm:$0xff]
    %v73 = vld [vmem:[%s0 + $0x168] sm:$0xff]
    %v74 = vld [vmem:[%s0 + $0x170] sm:$0xff]
    %v75 = vld [vmem:[%s0 + $0x178] sm:$0xff]
    %v76 = vld [vmem:[%s0 + $0x180] sm:$0xff]
    %v77 = vld [vmem:[%s0 + $0x188] sm:$0xff]
    %v78 = vld [vmem:[%s0 + $0x190] sm:$0xff]
    %v79 = vld [vmem:[%s0 + $0x198] sm:$0xff]
    %v80 = vld [vmem:[%s0 + $0x1a0] sm:$0xff]
    %v81 = vld [vmem:[%s0 + $0x1a8] sm:$0xff]
    %v82 = vld [vmem:[%s0 + $0x1b0] sm:$0xff]
    %v83 = vld [vmem:[%s0 + $0x1b8] sm:$0xff]
    %v84 = vld [vmem:[%s0 + $0x1c0] sm:$0xff]
    %v85 = vld [vmem:[%s0 + $0x1c8] sm:$0xff]
    %v86 = vld [vmem:[%s0 + $0x1d0] sm:$0xff]
    %v87 = vld [vmem:[%s0 + $0x1d8] sm:$0xff]
    %v88 = vld [vmem:[%s0 + $0x1e0] sm:$0xff]
    %v89 = vld [vmem:[%s0 + $0x1e8] sm:$0xff]
    %v90 = vld [vmem:[%s0 + $0x1f0] sm:$0xff]
    %v91 = vld [vmem:[%s0 + $0x1f8] sm:$0xff]
    %v92 = vpack.c.bf16 %v29, %v28
    %v93 = vpack.c.bf16 %v31, %v30
    %v94 = vpack.c.bf16 %v33, %v32
    %v95 = vpack.c.bf16 %v35, %v34
    %v96 = vpack.c.bf16 %v37, %v36
    %v97 = vpack.c.bf16 %v39, %v38
    %v98 = vpack.c.bf16 %v41, %v40
    %v99 = vpack.c.bf16 %v43, %v42
    %v100 = vpack.c.bf16 %v45, %v44
    %v101 = vpack.c.bf16 %v47, %v46
    %v102 = vpack.c.bf16 %v49, %v48
    %v103 = vpack.c.bf16 %v51, %v50
    %v104 = vpack.c.bf16 %v53, %v52
    %v105 = vpack.c.bf16 %v55, %v54
    %v106 = vpack.c.bf16 %v57, %v56
    %v107 = vpack.c.bf16 %v59, %v58
    %v108 = vpack.c.bf16 %v61, %v60
    %v109 = vpack.c.bf16 %v63, %v62
    %v110 = vpack.c.bf16 %v65, %v64
    %v111 = vpack.c.bf16 %v67, %v66
    %v112 = vpack.c.bf16 %v69, %v68
    %v113 = vpack.c.bf16 %v71, %v70
    %v114 = vpack.c.bf16 %v73, %v72
    %v115 = vpack.c.bf16 %v75, %v74
    %v116 = vpack.c.bf16 %v77, %v76
    %v117 = vpack.c.bf16 %v79, %v78
    %v118 = vpack.c.bf16 %v81, %v80
    %v119 = vpack.c.bf16 %v83, %v82
    %v120 = vpack.c.bf16 %v85, %v84
    %v121 = vpack.c.bf16 %v87, %v86
    %v122 = vpack.c.bf16 %v89, %v88
    %v123 = vpack.c.bf16 %v91, %v90
    %v124 = vld [vmem:[%s1] sm:$0xf]
    %v125 = vld [vmem:[%s1 + $0x4] sm:$0xf]
    %v126 = vld [vmem:[%s2] sm:$0x1]
    %v128 = vlaneseq
    %v129 = vshrl.u32 %v128, 7
    %v130 = vsub.s32 0, %v129
    %v131 = vrot.slane %v126, %v130
    %v135 = vunpack.c.l.b16 %v124
    %v136 = vunpack.c.l.b16 %v125
    %v137 = vpack.c.b16 %v136, %v135
    %vm139 = vcmask 130048
    %v141 = vsel %vm139, %v92, 0
    %v144 = vsel %vm139, %v93, 0
    %v147 = vsel %vm139, %v94, 0
    %v150 = vsel %vm139, %v95, 0
    %v153 = vsel %vm139, %v96, 0
    %v156 = vsel %vm139, %v97, 0
    %v159 = vsel %vm139, %v98, 0
    %v162 = vsel %vm139, %v99, 0
    %v165 = vsel %vm139, %v100, 0
    %v168 = vsel %vm139, %v101, 0
    %v171 = vsel %vm139, %v102, 0
    %v174 = vsel %vm139, %v103, 0
    %v177 = vsel %vm139, %v104, 0
    %v180 = vsel %vm139, %v105, 0
    %v183 = vsel %vm139, %v106, 0
    %v186 = vsel %vm139, %v107, 0
    %v189 = vsel %vm139, %v108, 0
    %v192 = vsel %vm139, %v109, 0
    %v195 = vsel %vm139, %v110, 0
    %v198 = vsel %vm139, %v111, 0
    %v201 = vsel %vm139, %v112, 0
    %v204 = vsel %vm139, %v113, 0
    %v207 = vsel %vm139, %v114, 0
    %v210 = vsel %vm139, %v115, 0
    %v213 = vsel %vm139, %v116, 0
    %v216 = vsel %vm139, %v117, 0
    %v219 = vsel %vm139, %v118, 0
    %v222 = vsel %vm139, %v119, 0
    %v225 = vsel %vm139, %v120, 0
    %v228 = vsel %vm139, %v121, 0
    %v231 = vsel %vm139, %v122, 0
    %v234 = vsel %vm139, %v123, 0
    %236 = vmatprep.subr.bf16.mxu0 0
    %237 = vmatpush1.bf16.msra.mxu0 %v137
    %238 = vmatprep.subr.bf16.mxu0 0
    %239 = vmatpush1.bf16.msra.mxu0 0
    %240 = vmatprep.subr.bf16.mxu0 0
    %241 = vmatpush1.bf16.msra.mxu0 0
    %242 = vmatprep.subr.bf16.mxu0 0
    %243 = vmatpush1.bf16.msra.mxu0 0
    %244 = vmatprep.subr.bf16.mxu0 0
    %245 = vmatpush1.bf16.msra.mxu0 0
    %246 = vmatprep.subr.bf16.mxu0 0
    %247 = vmatpush1.bf16.msra.mxu0 0
    %248 = vmatprep.subr.bf16.mxu0 0
    %249 = vmatpush1.bf16.msra.mxu0 0
    %250 = vmatprep.subr.bf16.mxu0 0
    %251 = vmatpush1.bf16.msra.mxu0 0
    %252 = vmatprep.subr.bf16.mxu0 0
    %253 = vmatpush1.bf16.msra.mxu0 0
    %254 = vmatprep.subr.bf16.mxu0 0
    %255 = vmatpush1.bf16.msra.mxu0 0
    %256 = vmatprep.subr.bf16.mxu0 0
    %257 = vmatpush1.bf16.msra.mxu0 0
    %258 = vmatprep.subr.bf16.mxu0 0
    %259 = vmatpush1.bf16.msra.mxu0 0
    %260 = vmatprep.subr.bf16.mxu0 0
    %261 = vmatpush1.bf16.msra.mxu0 0
    %262 = vmatprep.subr.bf16.mxu0 0
    %263 = vmatpush1.bf16.msra.mxu0 0
    %264 = vmatprep.subr.bf16.mxu0 0
    %265 = vmatpush1.bf16.msra.mxu0 0
    %266 = vmatprep.subr.bf16.mxu0 0
    %267 = vmatpush1.bf16.msra.mxu0 0
    %268 = vmatprep.mubr.bf16.mxu0 0
    %269 = vmatmul.mubr.bf16.gmra.mrb[0].mxu0 %v141
    %v270 = vpop.f32.mrb[0].mxu0
    %v271 = vadd.f32 %v131, %v270
    %v272 = vpop.f32.mrb[0].mxu0
    %v273 = vpop.f32.mrb[0].mxu0
    %v274 = vadd.f32 %v131, %v273
    %v275 = vpop.f32.mrb[0].mxu0
    %276 = vmatprep.mubr.bf16.mxu0 0
    %277 = vmatmul.mubr.bf16.gmra.mrb[0].mxu0 %v144
    %v278 = vpop.f32.mrb[0].mxu0
    %v279 = vadd.f32 %v131, %v278
    %v280 = vpop.f32.mrb[0].mxu0
    %v281 = vpop.f32.mrb[0].mxu0
    %v282 = vadd.f32 %v131, %v281
    %v283 = vpop.f32.mrb[0].mxu0
    %284 = vmatprep.mubr.bf16.mxu0 0
    %285 = vmatmul.mubr.bf16.gmra.mrb[0].mxu0 %v147
    %v286 = vpop.f32.mrb[0].mxu0
    %v287 = vadd.f32 %v131, %v286
    %v288 = vpop.f32.mrb[0].mxu0
    %v289 = vpop.f32.mrb[0].mxu0
    %v290 = vadd.f32 %v131, %v289
    %v291 = vpop.f32.mrb[0].mxu0
    %292 = vmatprep.mubr.bf16.mxu0 0
    %293 = vmatmul.mubr.bf16.gmra.mrb[0].mxu0 %v150
    %v294 = vpop.f32.mrb[0].mxu0
    %v295 = vadd.f32 %v131, %v294
    %v296 = vpop.f32.mrb[0].mxu0
    %v297 = vpop.f32.mrb[0].mxu0
    %v298 = vadd.f32 %v131, %v297
    %v299 = vpop.f32.mrb[0].mxu0
    %300 = vmatprep.mubr.bf16.mxu0 0
    %301 = vmatmul.mubr.bf16.gmra.mrb[0].mxu0 %v153
    %v302 = vpop.f32.mrb[0].mxu0
    %v303 = vadd.f32 %v131, %v302
    %v304 = vpop.f32.mrb[0].mxu0
    %v305 = vpop.f32.mrb[0].mxu0
    %v306 = vadd.f32 %v131, %v305
    %v307 = vpop.f32.mrb[0].mxu0
    %308 = vmatprep.mubr.bf16.mxu0 0
    %309 = vmatmul.mubr.bf16.gmra.mrb[0].mxu0 %v156
    %v310 = vpop.f32.mrb[0].mxu0
    %v311 = vadd.f32 %v131, %v310
    %v312 = vpop.f32.mrb[0].mxu0
    %v313 = vpop.f32.mrb[0].mxu0
    %v314 = vadd.f32 %v131, %v313
    %v315 = vpop.f32.mrb[0].mxu0
    %316 = vmatprep.mubr.bf16.mxu0 0
    %317 = vmatmul.mubr.bf16.gmra.mrb[0].mxu0 %v159
    %v318 = vpop.f32.mrb[0].mxu0
    %v319 = vadd.f32 %v131, %v318
    %v320 = vpop.f32.mrb[0].mxu0
    %v321 = vpop.f32.mrb[0].mxu0
    %v322 = vadd.f32 %v131, %v321
    %v323 = vpop.f32.mrb[0].mxu0
    %324 = vmatprep.mubr.bf16.mxu0 0
    %325 = vmatmul.mubr.bf16.gmra.mrb[0].mxu0 %v162
    %v326 = vpop.f32.mrb[0].mxu0
    %v327 = vadd.f32 %v131, %v326
    %v328 = vpop.f32.mrb[0].mxu0
    %v329 = vpop.f32.mrb[0].mxu0
    %v330 = vadd.f32 %v131, %v329
    %v331 = vpop.f32.mrb[0].mxu0
    %332 = vmatprep.mubr.bf16.mxu0 0
    %333 = vmatmul.mubr.bf16.gmra.mrb[0].mxu0 %v165
    %v334 = vpop.f32.mrb[0].mxu0
    %v335 = vadd.f32 %v131, %v334
    %v336 = vpop.f32.mrb[0].mxu0
    %v337 = vpop.f32.mrb[0].mxu0
    %v338 = vadd.f32 %v131, %v337
    %v339 = vpop.f32.mrb[0].mxu0
    %340 = vmatprep.mubr.bf16.mxu0 0
    %341 = vmatmul.mubr.bf16.gmra.mrb[0].mxu0 %v168
    %v342 = vpop.f32.mrb[0].mxu0
    %v343 = vadd.f32 %v131, %v342
    %v344 = vpop.f32.mrb[0].mxu0
    %v345 = vpop.f32.mrb[0].mxu0
    %v346 = vadd.f32 %v131, %v345
    %v347 = vpop.f32.mrb[0].mxu0
    %348 = vmatprep.mubr.bf16.mxu0 0
    %349 = vmatmul.mubr.bf16.gmra.mrb[0].mxu0 %v171
    %v350 = vpop.f32.mrb[0].mxu0
    %v351 = vadd.f32 %v131, %v350
    %v352 = vpop.f32.mrb[0].mxu0
    %v353 = vpop.f32.mrb[0].mxu0
    %v354 = vadd.f32 %v131, %v353
    %v355 = vpop.f32.mrb[0].mxu0
    %356 = vmatprep.mubr.bf16.mxu0 0
    %357 = vmatmul.mubr.bf16.gmra.mrb[0].mxu0 %v174
    %v358 = vpop.f32.mrb[0].mxu0
    %v359 = vadd.f32 %v131, %v358
    %v360 = vpop.f32.mrb[0].mxu0
    %v361 = vpop.f32.mrb[0].mxu0
    %v362 = vadd.f32 %v131, %v361
    %v363 = vpop.f32.mrb[0].mxu0
    %364 = vmatprep.mubr.bf16.mxu0 0
    %365 = vmatmul.mubr.bf16.gmra.mrb[0].mxu0 %v177
    %v366 = vpop.f32.mrb[0].mxu0
    %v367 = vadd.f32 %v131, %v366
    %v368 = vpop.f32.mrb[0].mxu0
    %v369 = vpop.f32.mrb[0].mxu0
    %v370 = vadd.f32 %v131, %v369
    %v371 = vpop.f32.mrb[0].mxu0
    %372 = vmatprep.mubr.bf16.mxu0 0
    %373 = vmatmul.mubr.bf16.gmra.mrb[0].mxu0 %v180
    %v374 = vpop.f32.mrb[0].mxu0
    %v375 = vadd.f32 %v131, %v374
    %v376 = vpop.f32.mrb[0].mxu0
    %v377 = vpop.f32.mrb[0].mxu0
    %v378 = vadd.f32 %v131, %v377
    %v379 = vpop.f32.mrb[0].mxu0
    %380 = vmatprep.mubr.bf16.mxu0 0
    %381 = vmatmul.mubr.bf16.gmra.mrb[0].mxu0 %v183
    %v382 = vpop.f32.mrb[0].mxu0
    %v383 = vadd.f32 %v131, %v382
    %v384 = vpop.f32.mrb[0].mxu0
    %v385 = vpop.f32.mrb[0].mxu0
    %v386 = vadd.f32 %v131, %v385
    %v387 = vpop.f32.mrb[0].mxu0
    %388 = vmatprep.mubr.bf16.mxu0 0
    %389 = vmatmul.mubr.bf16.gmra.mrb[0].mxu0 %v186
    %v390 = vpop.f32.mrb[0].mxu0
    %v391 = vadd.f32 %v131, %v390
    %v392 = vpop.f32.mrb[0].mxu0
    %v393 = vpop.f32.mrb[0].mxu0
    %v394 = vadd.f32 %v131, %v393
    %v395 = vpop.f32.mrb[0].mxu0
    %396 = vmatprep.mubr.bf16.mxu0 0
    %397 = vmatmul.mubr.bf16.gmra.mrb[0].mxu0 %v189
    %v398 = vpop.f32.mrb[0].mxu0
    %v399 = vadd.f32 %v131, %v398
    %v400 = vpop.f32.mrb[0].mxu0
    %v401 = vpop.f32.mrb[0].mxu0
    %v402 = vadd.f32 %v131, %v401
    %v403 = vpop.f32.mrb[0].mxu0
    %404 = vmatprep.mubr.bf16.mxu0 0
    %405 = vmatmul.mubr.bf16.gmra.mrb[0].mxu0 %v192
    %v406 = vpop.f32.mrb[0].mxu0
    %v407 = vadd.f32 %v131, %v406
    %v408 = vpop.f32.mrb[0].mxu0
    %v409 = vpop.f32.mrb[0].mxu0
    %v410 = vadd.f32 %v131, %v409
    %v411 = vpop.f32.mrb[0].mxu0
    %412 = vmatprep.mubr.bf16.mxu0 0
    %413 = vmatmul.mubr.bf16.gmra.mrb[0].mxu0 %v195
    %v414 = vpop.f32.mrb[0].mxu0
    %v415 = vadd.f32 %v131, %v414
    %v416 = vpop.f32.mrb[0].mxu0
    %v417 = vpop.f32.mrb[0].mxu0
    %v418 = vadd.f32 %v131, %v417
    %v419 = vpop.f32.mrb[0].mxu0
    %420 = vmatprep.mubr.bf16.mxu0 0
    %421 = vmatmul.mubr.bf16.gmra.mrb[0].mxu0 %v198
    %v422 = vpop.f32.mrb[0].mxu0
    %v423 = vadd.f32 %v131, %v422
    %v424 = vpop.f32.mrb[0].mxu0
    %v425 = vpop.f32.mrb[0].mxu0
    %v426 = vadd.f32 %v131, %v425
    %v427 = vpop.f32.mrb[0].mxu0
    %428 = vmatprep.mubr.bf16.mxu0 0
    %429 = vmatmul.mubr.bf16.gmra.mrb[0].mxu0 %v201
    %v430 = vpop.f32.mrb[0].mxu0
    %v431 = vadd.f32 %v131, %v430
    %v432 = vpop.f32.mrb[0].mxu0
    %v433 = vpop.f32.mrb[0].mxu0
    %v434 = vadd.f32 %v131, %v433
    %v435 = vpop.f32.mrb[0].mxu0
    %436 = vmatprep.mubr.bf16.mxu0 0
    %437 = vmatmul.mubr.bf16.gmra.mrb[0].mxu0 %v204
    %v438 = vpop.f32.mrb[0].mxu0
    %v439 = vadd.f32 %v131, %v438
    %v440 = vpop.f32.mrb[0].mxu0
    %v441 = vpop.f32.mrb[0].mxu0
    %v442 = vadd.f32 %v131, %v441
    %v443 = vpop.f32.mrb[0].mxu0
    %444 = vmatprep.mubr.bf16.mxu0 0
    %445 = vmatmul.mubr.bf16.gmra.mrb[0].mxu0 %v207
    %v446 = vpop.f32.mrb[0].mxu0
    %v447 = vadd.f32 %v131, %v446
    %v448 = vpop.f32.mrb[0].mxu0
    %v449 = vpop.f32.mrb[0].mxu0
    %v450 = vadd.f32 %v131, %v449
    %v451 = vpop.f32.mrb[0].mxu0
    %452 = vmatprep.mubr.bf16.mxu0 0
    %453 = vmatmul.mubr.bf16.gmra.mrb[0].mxu0 %v210
    %v454 = vpop.f32.mrb[0].mxu0
    %v455 = vadd.f32 %v131, %v454
    %v456 = vpop.f32.mrb[0].mxu0
    %v457 = vpop.f32.mrb[0].mxu0
    %v458 = vadd.f32 %v131, %v457
    %v459 = vpop.f32.mrb[0].mxu0
    %460 = vmatprep.mubr.bf16.mxu0 0
    %461 = vmatmul.mubr.bf16.gmra.mrb[0].mxu0 %v213
    %v462 = vpop.f32.mrb[0].mxu0
    %v463 = vadd.f32 %v131, %v462
    %v464 = vpop.f32.mrb[0].mxu0
    %v465 = vpop.f32.mrb[0].mxu0
    %v466 = vadd.f32 %v131, %v465
    %v467 = vpop.f32.mrb[0].mxu0
    %468 = vmatprep.mubr.bf16.mxu0 0
    %469 = vmatmul.mubr.bf16.gmra.mrb[0].mxu0 %v216
    %v470 = vpop.f32.mrb[0].mxu0
    %v471 = vadd.f32 %v131, %v470
    %v472 = vpop.f32.mrb[0].mxu0
    %v473 = vpop.f32.mrb[0].mxu0
    %v474 = vadd.f32 %v131, %v473
    %v475 = vpop.f32.mrb[0].mxu0
    %476 = vmatprep.mubr.bf16.mxu0 0
    %477 = vmatmul.mubr.bf16.gmra.mrb[0].mxu0 %v219
    %v478 = vpop.f32.mrb[0].mxu0
    %v479 = vadd.f32 %v131, %v478
    %v480 = vpop.f32.mrb[0].mxu0
    %v481 = vpop.f32.mrb[0].mxu0
    %v482 = vadd.f32 %v131, %v481
    %v483 = vpop.f32.mrb[0].mxu0
    %484 = vmatprep.mubr.bf16.mxu0 0
    %485 = vmatmul.mubr.bf16.gmra.mrb[0].mxu0 %v222
    %v486 = vpop.f32.mrb[0].mxu0
    %v487 = vadd.f32 %v131, %v486
    %v488 = vpop.f32.mrb[0].mxu0
    %v489 = vpop.f32.mrb[0].mxu0
    %v490 = vadd.f32 %v131, %v489
    %v491 = vpop.f32.mrb[0].mxu0
    %492 = vmatprep.mubr.bf16.mxu0 0
    %493 = vmatmul.mubr.bf16.gmra.mrb[0].mxu0 %v225
    %v494 = vpop.f32.mrb[0].mxu0
    %v495 = vadd.f32 %v131, %v494
    %v496 = vpop.f32.mrb[0].mxu0
    %v497 = vpop.f32.mrb[0].mxu0
    %v498 = vadd.f32 %v131, %v497
    %v499 = vpop.f32.mrb[0].mxu0
    %500 = vmatprep.mubr.bf16.mxu0 0
    %501 = vmatmul.mubr.bf16.gmra.mrb[0].mxu0 %v228
    %v502 = vpop.f32.mrb[0].mxu0
    %v503 = vadd.f32 %v131, %v502
    %v504 = vpop.f32.mrb[0].mxu0
    %v505 = vpop.f32.mrb[0].mxu0
    %v506 = vadd.f32 %v131, %v505
    %v507 = vpop.f32.mrb[0].mxu0
    %508 = vmatprep.mubr.bf16.mxu0 0
    %509 = vmatmul.mubr.bf16.gmra.mrb[0].mxu0 %v231
    %v510 = vpop.f32.mrb[0].mxu0
    %v511 = vadd.f32 %v131, %v510
    %v512 = vpop.f32.mrb[0].mxu0
    %v513 = vpop.f32.mrb[0].mxu0
    %v514 = vadd.f32 %v131, %v513
    %v515 = vpop.f32.mrb[0].mxu0
    %516 = vmatprep.mubr.bf16.mxu0 0
    %517 = vmatmul.mubr.bf16.gmra.mrb[0].mxu0 %v234
    %v518 = vpop.f32.mrb[0].mxu0
    %v519 = vadd.f32 %v131, %v518
    %v520 = vpop.f32.mrb[0].mxu0
    %v521 = vpop.f32.mrb[0].mxu0
    %v522 = vadd.f32 %v131, %v521
    %v523 = vpop.f32.mrb[0].mxu0
    %524 = vdwg.mxu0
    %v525 = vmax.f32 %v271, 0.0
    %v526 = vmax.f32 %v274, 0.0
    %v527 = vmax.f32 %v279, 0.0
    %v528 = vmax.f32 %v282, 0.0
    %v529 = vmax.f32 %v287, 0.0
    %v530 = vmax.f32 %v290, 0.0
    %v531 = vmax.f32 %v295, 0.0
    %v532 = vmax.f32 %v298, 0.0
    %v533 = vmax.f32 %v303, 0.0
    %v534 = vmax.f32 %v306, 0.0
    %v535 = vmax.f32 %v311, 0.0
    %v536 = vmax.f32 %v314, 0.0
    %v537 = vmax.f32 %v319, 0.0
    %v538 = vmax.f32 %v322, 0.0
    %v539 = vmax.f32 %v327, 0.0
    %v540 = vmax.f32 %v330, 0.0
    %v541 = vmax.f32 %v335, 0.0
    %v542 = vmax.f32 %v338, 0.0
    %v543 = vmax.f32 %v343, 0.0
    %v544 = vmax.f32 %v346, 0.0
    %v545 = vmax.f32 %v351, 0.0
    %v546 = vmax.f32 %v354, 0.0
    %v547 = vmax.f32 %v359, 0.0
    %v548 = vmax.f32 %v362, 0.0
    %v549 = vmax.f32 %v367, 0.0
    %v550 = vmax.f32 %v370, 0.0
    %v551 = vmax.f32 %v375, 0.0
    %v552 = vmax.f32 %v378, 0.0
    %v553 = vmax.f32 %v383, 0.0
    %v554 = vmax.f32 %v386, 0.0
    %v555 = vmax.f32 %v391, 0.0
    %v556 = vmax.f32 %v394, 0.0
    %v557 = vmax.f32 %v399, 0.0
    %v558 = vmax.f32 %v402, 0.0
    %v559 = vmax.f32 %v407, 0.0
    %v560 = vmax.f32 %v410, 0.0
    %v561 = vmax.f32 %v415, 0.0
    %v562 = vmax.f32 %v418, 0.0
    %v563 = vmax.f32 %v423, 0.0
    %v564 = vmax.f32 %v426, 0.0
    %v565 = vmax.f32 %v431, 0.0
    %v566 = vmax.f32 %v434, 0.0
    %v567 = vmax.f32 %v439, 0.0
    %v568 = vmax.f32 %v442, 0.0
    %v569 = vmax.f32 %v447, 0.0
    %v570 = vmax.f32 %v450, 0.0
    %v571 = vmax.f32 %v455, 0.0
    %v572 = vmax.f32 %v458, 0.0
    %v573 = vmax.f32 %v463, 0.0
    %v574 = vmax.f32 %v466, 0.0
    %v575 = vmax.f32 %v471, 0.0
    %v576 = vmax.f32 %v474, 0.0
    %v577 = vmax.f32 %v479, 0.0
    %v578 = vmax.f32 %v482, 0.0
    %v579 = vmax.f32 %v487, 0.0
    %v580 = vmax.f32 %v490, 0.0
    %v581 = vmax.f32 %v495, 0.0
    %v582 = vmax.f32 %v498, 0.0
    %v583 = vmax.f32 %v503, 0.0
    %v584 = vmax.f32 %v506, 0.0
    %v585 = vmax.f32 %v511, 0.0
    %v586 = vmax.f32 %v514, 0.0
    %v587 = vmax.f32 %v519, 0.0
    %v588 = vmax.f32 %v522, 0.0
    %v589 = vpack.c.bf16 %v526, %v525
    %v590 = vpack.c.bf16 %v528, %v527
    %v591 = vpack.c.bf16 %v530, %v529
    %v592 = vpack.c.bf16 %v532, %v531
    %v593 = vpack.c.bf16 %v534, %v533
    %v594 = vpack.c.bf16 %v536, %v535
    %v595 = vpack.c.bf16 %v538, %v537
    %v596 = vpack.c.bf16 %v540, %v539
    %v597 = vpack.c.bf16 %v542, %v541
    %v598 = vpack.c.bf16 %v544, %v543
    %v599 = vpack.c.bf16 %v546, %v545
    %v600 = vpack.c.bf16 %v548, %v547
    %v601 = vpack.c.bf16 %v550, %v549
    %v602 = vpack.c.bf16 %v552, %v551
    %v603 = vpack.c.bf16 %v554, %v553
    %v604 = vpack.c.bf16 %v556, %v555
    %v605 = vpack.c.bf16 %v558, %v557
    %v606 = vpack.c.bf16 %v560, %v559
    %v607 = vpack.c.bf16 %v562, %v561
    %v608 = vpack.c.bf16 %v564, %v563
    %v609 = vpack.c.bf16 %v566, %v565
    %v610 = vpack.c.bf16 %v568, %v567
    %v611 = vpack.c.bf16 %v570, %v569
    %v612 = vpack.c.bf16 %v572, %v571
    %v613 = vpack.c.bf16 %v574, %v573
    %v614 = vpack.c.bf16 %v576, %v575
    %v615 = vpack.c.bf16 %v578, %v577
    %v616 = vpack.c.bf16 %v580, %v579
    %v617 = vpack.c.bf16 %v582, %v581
    %v618 = vpack.c.bf16 %v584, %v583
    %v619 = vpack.c.bf16 %v586, %v585
    %v620 = vpack.c.bf16 %v588, %v587
    %v621 = vld [vmem:[%s3] sm:$0xf]
    %v622 = vld [vmem:[%s3 + $0x4] sm:$0xf]
    %v623 = vld [vmem:[%s3 + $0x8] sm:$0xf]
    %v624 = vld [vmem:[%s3 + $0xc] sm:$0xf]
    %v625 = vld [vmem:[%s4] sm:$0x1]
    %v627 = vlaneseq
    %v628 = vshrl.u32 %v627, 7
    %v629 = vsub.s32 0, %v628
    %v630 = vrot.slane %v625, %v629
    %v636 = vunpack.c.l.b16 %v621
    %v637 = vunpack.c.l.b16 %v622
    %v638 = vunpack.c.l.b16 %v623
    %v639 = vunpack.c.l.b16 %v624
    %v640 = vpack.c.b16 %v637, %v636
    %v641 = vpack.c.b16 %v639, %v638
    %vm644 = vcmask 261120
    %v646 = vsel %vm644, %v589, 0
    %v649 = vsel %vm644, %v590, 0
    %v652 = vsel %vm644, %v591, 0
    %v655 = vsel %vm644, %v592, 0
    %v658 = vsel %vm644, %v593, 0
    %v661 = vsel %vm644, %v594, 0
    %v664 = vsel %vm644, %v595, 0
    %v667 = vsel %vm644, %v596, 0
    %v670 = vsel %vm644, %v597, 0
    %v673 = vsel %vm644, %v598, 0
    %v676 = vsel %vm644, %v599, 0
    %v679 = vsel %vm644, %v600, 0
    %v682 = vsel %vm644, %v601, 0
    %v685 = vsel %vm644, %v602, 0
    %v688 = vsel %vm644, %v603, 0
    %v691 = vsel %vm644, %v604, 0
    %v694 = vsel %vm644, %v605, 0
    %v697 = vsel %vm644, %v606, 0
    %v700 = vsel %vm644, %v607, 0
    %v703 = vsel %vm644, %v608, 0
    %v706 = vsel %vm644, %v609, 0
    %v709 = vsel %vm644, %v610, 0
    %v712 = vsel %vm644, %v611, 0
    %v715 = vsel %vm644, %v612, 0
    %v718 = vsel %vm644, %v613, 0
    %v721 = vsel %vm644, %v614, 0
    %v724 = vsel %vm644, %v615, 0
    %v727 = vsel %vm644, %v616, 0
    %v730 = vsel %vm644, %v617, 0
    %v733 = vsel %vm644, %v618, 0
    %v736 = vsel %vm644, %v619, 0
    %v739 = vsel %vm644, %v620, 0
    %741 = vmatprep.subr.bf16.mxu0 0
    %742 = vmatpush1.bf16.msra.mxu0 %v640
    %743 = vmatprep.subr.bf16.mxu0 0
    %744 = vmatpush1.bf16.msra.mxu0 %v641
    %745 = vmatprep.subr.bf16.mxu0 0
    %746 = vmatpush1.bf16.msra.mxu0 0
    %747 = vmatprep.subr.bf16.mxu0 0
    %748 = vmatpush1.bf16.msra.mxu0 0
    %749 = vmatprep.subr.bf16.mxu0 0
    %750 = vmatpush1.bf16.msra.mxu0 0
    %751 = vmatprep.subr.bf16.mxu0 0
    %752 = vmatpush1.bf16.msra.mxu0 0
    %753 = vmatprep.subr.bf16.mxu0 0
    %754 = vmatpush1.bf16.msra.mxu0 0
    %755 = vmatprep.subr.bf16.mxu0 0
    %756 = vmatpush1.bf16.msra.mxu0 0
    %757 = vmatprep.subr.bf16.mxu0 0
    %758 = vmatpush1.bf16.msra.mxu0 0
    %759 = vmatprep.subr.bf16.mxu0 0
    %760 = vmatpush1.bf16.msra.mxu0 0
    %761 = vmatprep.subr.bf16.mxu0 0
    %762 = vmatpush1.bf16.msra.mxu0 0
    %763 = vmatprep.subr.bf16.mxu0 0
    %764 = vmatpush1.bf16.msra.mxu0 0
    %765 = vmatprep.subr.bf16.mxu0 0
    %766 = vmatpush1.bf16.msra.mxu0 0
    %767 = vmatprep.subr.bf16.mxu0 0
    %768 = vmatpush1.bf16.msra.mxu0 0
    %769 = vmatprep.subr.bf16.mxu0 0
    %770 = vmatpush1.bf16.msra.mxu0 0
    %771 = vmatprep.subr.bf16.mxu0 0
    %772 = vmatpush1.bf16.msra.mxu0 0
    %773 = vmatprep.mubr.bf16.mxu0 0
    %774 = vmatmul.mubr.bf16.gmra.mrb[0].mxu0 %v646
    %v775 = vpop.f32.mrb[0].mxu0
    %v776 = vadd.f32 %v630, %v775
    %v777 = vpop.f32.mrb[0].mxu0
    %v778 = vpop.f32.mrb[0].mxu0
    %v779 = vadd.f32 %v630, %v778
    %v780 = vpop.f32.mrb[0].mxu0
    %781 = vmatprep.mubr.bf16.mxu0 0
    %782 = vmatmul.mubr.bf16.gmra.mrb[0].mxu0 %v649
    %v783 = vpop.f32.mrb[0].mxu0
    %v784 = vadd.f32 %v630, %v783
    %v785 = vpop.f32.mrb[0].mxu0
    %v786 = vpop.f32.mrb[0].mxu0
    %v787 = vadd.f32 %v630, %v786
    %v788 = vpop.f32.mrb[0].mxu0
    %789 = vmatprep.mubr.bf16.mxu0 0
    %790 = vmatmul.mubr.bf16.gmra.mrb[0].mxu0 %v652
    %v791 = vpop.f32.mrb[0].mxu0
    %v792 = vadd.f32 %v630, %v791
    %v793 = vpop.f32.mrb[0].mxu0
    %v794 = vpop.f32.mrb[0].mxu0
    %v795 = vadd.f32 %v630, %v794
    %v796 = vpop.f32.mrb[0].mxu0
    %797 = vmatprep.mubr.bf16.mxu0 0
    %798 = vmatmul.mubr.bf16.gmra.mrb[0].mxu0 %v655
    %v799 = vpop.f32.mrb[0].mxu0
    %v800 = vadd.f32 %v630, %v799
    %v801 = vpop.f32.mrb[0].mxu0
    %v802 = vpop.f32.mrb[0].mxu0
    %v803 = vadd.f32 %v630, %v802
    %v804 = vpop.f32.mrb[0].mxu0
    %805 = vmatprep.mubr.bf16.mxu0 0
    %806 = vmatmul.mubr.bf16.gmra.mrb[0].mxu0 %v658
    %v807 = vpop.f32.mrb[0].mxu0
    %v808 = vadd.f32 %v630, %v807
    %v809 = vpop.f32.mrb[0].mxu0
    %v810 = vpop.f32.mrb[0].mxu0
    %v811 = vadd.f32 %v630, %v810
    %v812 = vpop.f32.mrb[0].mxu0
    %813 = vmatprep.mubr.bf16.mxu0 0
    %814 = vmatmul.mubr.bf16.gmra.mrb[0].mxu0 %v661
    %v815 = vpop.f32.mrb[0].mxu0
    %v816 = vadd.f32 %v630, %v815
    %v817 = vpop.f32.mrb[0].mxu0
    %v818 = vpop.f32.mrb[0].mxu0
    %v819 = vadd.f32 %v630, %v818
    %v820 = vpop.f32.mrb[0].mxu0
    %821 = vmatprep.mubr.bf16.mxu0 0
    %822 = vmatmul.mubr.bf16.gmra.mrb[0].mxu0 %v664
    %v823 = vpop.f32.mrb[0].mxu0
    %v824 = vadd.f32 %v630, %v823
    %v825 = vpop.f32.mrb[0].mxu0
    %v826 = vpop.f32.mrb[0].mxu0
    %v827 = vadd.f32 %v630, %v826
    %v828 = vpop.f32.mrb[0].mxu0
    %829 = vmatprep.mubr.bf16.mxu0 0
    %830 = vmatmul.mubr.bf16.gmra.mrb[0].mxu0 %v667
    %v831 = vpop.f32.mrb[0].mxu0
    %v832 = vadd.f32 %v630, %v831
    %v833 = vpop.f32.mrb[0].mxu0
    %v834 = vpop.f32.mrb[0].mxu0
    %v835 = vadd.f32 %v630, %v834
    %v836 = vpop.f32.mrb[0].mxu0
    %837 = vmatprep.mubr.bf16.mxu0 0
    %838 = vmatmul.mubr.bf16.gmra.mrb[0].mxu0 %v670
    %v839 = vpop.f32.mrb[0].mxu0
    %v840 = vadd.f32 %v630, %v839
    %v841 = vpop.f32.mrb[0].mxu0
    %v842 = vpop.f32.mrb[0].mxu0
    %v843 = vadd.f32 %v630, %v842
    %v844 = vpop.f32.mrb[0].mxu0
    %845 = vmatprep.mubr.bf16.mxu0 0
    %846 = vmatmul.mubr.bf16.gmra.mrb[0].mxu0 %v673
    %v847 = vpop.f32.mrb[0].mxu0
    %v848 = vadd.f32 %v630, %v847
    %v849 = vpop.f32.mrb[0].mxu0
    %v850 = vpop.f32.mrb[0].mxu0
    %v851 = vadd.f32 %v630, %v850
    %v852 = vpop.f32.mrb[0].mxu0
    %853 = vmatprep.mubr.bf16.mxu0 0
    %854 = vmatmul.mubr.bf16.gmra.mrb[0].mxu0 %v676
    %v855 = vpop.f32.mrb[0].mxu0
    %v856 = vadd.f32 %v630, %v855
    %v857 = vpop.f32.mrb[0].mxu0
    %v858 = vpop.f32.mrb[0].mxu0
    %v859 = vadd.f32 %v630, %v858
    %v860 = vpop.f32.mrb[0].mxu0
    %861 = vmatprep.mubr.bf16.mxu0 0
    %862 = vmatmul.mubr.bf16.gmra.mrb[0].mxu0 %v679
    %v863 = vpop.f32.mrb[0].mxu0
    %v864 = vadd.f32 %v630, %v863
    %v865 = vpop.f32.mrb[0].mxu0
    %v866 = vpop.f32.mrb[0].mxu0
    %v867 = vadd.f32 %v630, %v866
    %v868 = vpop.f32.mrb[0].mxu0
    %869 = vmatprep.mubr.bf16.mxu0 0
    %870 = vmatmul.mubr.bf16.gmra.mrb[0].mxu0 %v682
    %v871 = vpop.f32.mrb[0].mxu0
    %v872 = vadd.f32 %v630, %v871
    %v873 = vpop.f32.mrb[0].mxu0
    %v874 = vpop.f32.mrb[0].mxu0
    %v875 = vadd.f32 %v630, %v874
    %v876 = vpop.f32.mrb[0].mxu0
    %877 = vmatprep.mubr.bf16.mxu0 0
    %878 = vmatmul.mubr.bf16.gmra.mrb[0].mxu0 %v685
    %v879 = vpop.f32.mrb[0].mxu0
    %v880 = vadd.f32 %v630, %v879
    %v881 = vpop.f32.mrb[0].mxu0
    %v882 = vpop.f32.mrb[0].mxu0
    %v883 = vadd.f32 %v630, %v882
    %v884 = vpop.f32.mrb[0].mxu0
    %885 = vmatprep.mubr.bf16.mxu0 0
    %886 = vmatmul.mubr.bf16.gmra.mrb[0].mxu0 %v688
    %v887 = vpop.f32.mrb[0].mxu0
    %v888 = vadd.f32 %v630, %v887
    %v889 = vpop.f32.mrb[0].mxu0
    %v890 = vpop.f32.mrb[0].mxu0
    %v891 = vadd.f32 %v630, %v890
    %v892 = vpop.f32.mrb[0].mxu0
    %893 = vmatprep.mubr.bf16.mxu0 0
    %894 = vmatmul.mubr.bf16.gmra.mrb[0].mxu0 %v691
    %v895 = vpop.f32.mrb[0].mxu0
    %v896 = vadd.f32 %v630, %v895
    %v897 = vpop.f32.mrb[0].mxu0
    %v898 = vpop.f32.mrb[0].mxu0
    %v899 = vadd.f32 %v630, %v898
    %v900 = vpop.f32.mrb[0].mxu0
    %901 = vmatprep.mubr.bf16.mxu0 0
    %902 = vmatmul.mubr.bf16.gmra.mrb[0].mxu0 %v694
    %v903 = vpop.f32.mrb[0].mxu0
    %v904 = vadd.f32 %v630, %v903
    %v905 = vpop.f32.mrb[0].mxu0
    %v906 = vpop.f32.mrb[0].mxu0
    %v907 = vadd.f32 %v630, %v906
    %v908 = vpop.f32.mrb[0].mxu0
    %909 = vmatprep.mubr.bf16.mxu0 0
    %910 = vmatmul.mubr.bf16.gmra.mrb[0].mxu0 %v697
    %v911 = vpop.f32.mrb[0].mxu0
    %v912 = vadd.f32 %v630, %v911
    %v913 = vpop.f32.mrb[0].mxu0
    %v914 = vpop.f32.mrb[0].mxu0
    %v915 = vadd.f32 %v630, %v914
    %v916 = vpop.f32.mrb[0].mxu0
    %917 = vmatprep.mubr.bf16.mxu0 0
    %918 = vmatmul.mubr.bf16.gmra.mrb[0].mxu0 %v700
    %v919 = vpop.f32.mrb[0].mxu0
    %v920 = vadd.f32 %v630, %v919
    %v921 = vpop.f32.mrb[0].mxu0
    %v922 = vpop.f32.mrb[0].mxu0
    %v923 = vadd.f32 %v630, %v922
    %v924 = vpop.f32.mrb[0].mxu0
    %925 = vmatprep.mubr.bf16.mxu0 0
    %926 = vmatmul.mubr.bf16.gmra.mrb[0].mxu0 %v703
    %v927 = vpop.f32.mrb[0].mxu0
    %v928 = vadd.f32 %v630, %v927
    %v929 = vpop.f32.mrb[0].mxu0
    %v930 = vpop.f32.mrb[0].mxu0
    %v931 = vadd.f32 %v630, %v930
    %v932 = vpop.f32.mrb[0].mxu0
    %933 = vmatprep.mubr.bf16.mxu0 0
    %934 = vmatmul.mubr.bf16.gmra.mrb[0].mxu0 %v706
    %v935 = vpop.f32.mrb[0].mxu0
    %v936 = vadd.f32 %v630, %v935
    %v937 = vpop.f32.mrb[0].mxu0
    %v938 = vpop.f32.mrb[0].mxu0
    %v939 = vadd.f32 %v630, %v938
    %v940 = vpop.f32.mrb[0].mxu0
    %941 = vmatprep.mubr.bf16.mxu0 0
    %942 = vmatmul.mubr.bf16.gmra.mrb[0].mxu0 %v709
    %v943 = vpop.f32.mrb[0].mxu0
    %v944 = vadd.f32 %v630, %v943
    %v945 = vpop.f32.mrb[0].mxu0
    %v946 = vpop.f32.mrb[0].mxu0
    %v947 = vadd.f32 %v630, %v946
    %v948 = vpop.f32.mrb[0].mxu0
    %949 = vmatprep.mubr.bf16.mxu0 0
    %950 = vmatmul.mubr.bf16.gmra.mrb[0].mxu0 %v712
    %v951 = vpop.f32.mrb[0].mxu0
    %v952 = vadd.f32 %v630, %v951
    %v953 = vpop.f32.mrb[0].mxu0
    %v954 = vpop.f32.mrb[0].mxu0
    %v955 = vadd.f32 %v630, %v954
    %v956 = vpop.f32.mrb[0].mxu0
    %957 = vmatprep.mubr.bf16.mxu0 0
    %958 = vmatmul.mubr.bf16.gmra.mrb[0].mxu0 %v715
    %v959 = vpop.f32.mrb[0].mxu0
    %v960 = vadd.f32 %v630, %v959
    %v961 = vpop.f32.mrb[0].mxu0
    %v962 = vpop.f32.mrb[0].mxu0
    %v963 = vadd.f32 %v630, %v962
    %v964 = vpop.f32.mrb[0].mxu0
    %965 = vmatprep.mubr.bf16.mxu0 0
    %966 = vmatmul.mubr.bf16.gmra.mrb[0].mxu0 %v718
    %v967 = vpop.f32.mrb[0].mxu0
    %v968 = vadd.f32 %v630, %v967
    %v969 = vpop.f32.mrb[0].mxu0
    %v970 = vpop.f32.mrb[0].mxu0
    %v971 = vadd.f32 %v630, %v970
    %v972 = vpop.f32.mrb[0].mxu0
    %973 = vmatprep.mubr.bf16.mxu0 0
    %974 = vmatmul.mubr.bf16.gmra.mrb[0].mxu0 %v721
    %v975 = vpop.f32.mrb[0].mxu0
    %v976 = vadd.f32 %v630, %v975
    %v977 = vpop.f32.mrb[0].mxu0
    %v978 = vpop.f32.mrb[0].mxu0
    %v979 = vadd.f32 %v630, %v978
    %v980 = vpop.f32.mrb[0].mxu0
    %981 = vmatprep.mubr.bf16.mxu0 0
    %982 = vmatmul.mubr.bf16.gmra.mrb[0].mxu0 %v724
    %v983 = vpop.f32.mrb[0].mxu0
    %v984 = vadd.f32 %v630, %v983
    %v985 = vpop.f32.mrb[0].mxu0
    %v986 = vpop.f32.mrb[0].mxu0
    %v987 = vadd.f32 %v630, %v986
    %v988 = vpop.f32.mrb[0].mxu0
    %989 = vmatprep.mubr.bf16.mxu0 0
    %990 = vmatmul.mubr.bf16.gmra.mrb[0].mxu0 %v727
    %v991 = vpop.f32.mrb[0].mxu0
    %v992 = vadd.f32 %v630, %v991
    %v993 = vpop.f32.mrb[0].mxu0
    %v994 = vpop.f32.mrb[0].mxu0
    %v995 = vadd.f32 %v630, %v994
    %v996 = vpop.f32.mrb[0].mxu0
    %997 = vmatprep.mubr.bf16.mxu0 0
    %998 = vmatmul.mubr.bf16.gmra.mrb[0].mxu0 %v730
    %v999 = vpop.f32.mrb[0].mxu0
    %v1000 = vadd.f32 %v630, %v999
    %v1001 = vpop.f32.mrb[0].mxu0
    %v1002 = vpop.f32.mrb[0].mxu0
    %v1003 = vadd.f32 %v630, %v1002
    %v1004 = vpop.f32.mrb[0].mxu0
    %1005 = vmatprep.mubr.bf16.mxu0 0
    %1006 = vmatmul.mubr.bf16.gmra.mrb[0].mxu0 %v733
    %v1007 = vpop.f32.mrb[0].mxu0
    %v1008 = vadd.f32 %v630, %v1007
    %v1009 = vpop.f32.mrb[0].mxu0
    %v1010 = vpop.f32.mrb[0].mxu0
    %v1011 = vadd.f32 %v630, %v1010
    %v1012 = vpop.f32.mrb[0].mxu0
    %1013 = vmatprep.mubr.bf16.mxu0 0
    %1014 = vmatmul.mubr.bf16.gmra.mrb[0].mxu0 %v736
    %v1015 = vpop.f32.mrb[0].mxu0
    %v1016 = vadd.f32 %v630, %v1015
    %v1017 = vpop.f32.mrb[0].mxu0
    %v1018 = vpop.f32.mrb[0].mxu0
    %v1019 = vadd.f32 %v630, %v1018
    %v1020 = vpop.f32.mrb[0].mxu0
    %1021 = vmatprep.mubr.bf16.mxu0 0
    %1022 = vmatmul.mubr.bf16.gmra.mrb[0].mxu0 %v739
    %v1023 = vpop.f32.mrb[0].mxu0
    %v1024 = vadd.f32 %v630, %v1023
    %v1025 = vpop.f32.mrb[0].mxu0
    %v1026 = vpop.f32.mrb[0].mxu0
    %v1027 = vadd.f32 %v630, %v1026
    %v1028 = vpop.f32.mrb[0].mxu0
    %1029 = vdwg.mxu0
    %v1030 = vmax.f32 %v776, 0.0
    %v1031 = vmax.f32 %v779, 0.0
    %v1032 = vmax.f32 %v784, 0.0
    %v1033 = vmax.f32 %v787, 0.0
    %v1034 = vmax.f32 %v792, 0.0
    %v1035 = vmax.f32 %v795, 0.0
    %v1036 = vmax.f32 %v800, 0.0
    %v1037 = vmax.f32 %v803, 0.0
    %v1038 = vmax.f32 %v808, 0.0
    %v1039 = vmax.f32 %v811, 0.0
    %v1040 = vmax.f32 %v816, 0.0
    %v1041 = vmax.f32 %v819, 0.0
    %v1042 = vmax.f32 %v824, 0.0
    %v1043 = vmax.f32 %v827, 0.0
    %v1044 = vmax.f32 %v832, 0.0
    %v1045 = vmax.f32 %v835, 0.0
    %v1046 = vmax.f32 %v840, 0.0
    %v1047 = vmax.f32 %v843, 0.0
    %v1048 = vmax.f32 %v848, 0.0
    %v1049 = vmax.f32 %v851, 0.0
    %v1050 = vmax.f32 %v856, 0.0
    %v1051 = vmax.f32 %v859, 0.0
    %v1052 = vmax.f32 %v864, 0.0
    %v1053 = vmax.f32 %v867, 0.0
    %v1054 = vmax.f32 %v872, 0.0
    %v1055 = vmax.f32 %v875, 0.0
    %v1056 = vmax.f32 %v880, 0.0
    %v1057 = vmax.f32 %v883, 0.0
    %v1058 = vmax.f32 %v888, 0.0
    %v1059 = vmax.f32 %v891, 0.0
    %v1060 = vmax.f32 %v896, 0.0
    %v1061 = vmax.f32 %v899, 0.0
    %v1062 = vmax.f32 %v904, 0.0
    %v1063 = vmax.f32 %v907, 0.0
    %v1064 = vmax.f32 %v912, 0.0
    %v1065 = vmax.f32 %v915, 0.0
    %v1066 = vmax.f32 %v920, 0.0
    %v1067 = vmax.f32 %v923, 0.0
    %v1068 = vmax.f32 %v928, 0.0
    %v1069 = vmax.f32 %v931, 0.0
    %v1070 = vmax.f32 %v936, 0.0
    %v1071 = vmax.f32 %v939, 0.0
    %v1072 = vmax.f32 %v944, 0.0
    %v1073 = vmax.f32 %v947, 0.0
    %v1074 = vmax.f32 %v952, 0.0
    %v1075 = vmax.f32 %v955, 0.0
    %v1076 = vmax.f32 %v960, 0.0
    %v1077 = vmax.f32 %v963, 0.0
    %v1078 = vmax.f32 %v968, 0.0
    %v1079 = vmax.f32 %v971, 0.0
    %v1080 = vmax.f32 %v976, 0.0
    %v1081 = vmax.f32 %v979, 0.0
    %v1082 = vmax.f32 %v984, 0.0
    %v1083 = vmax.f32 %v987, 0.0
    %v1084 = vmax.f32 %v992, 0.0
    %v1085 = vmax.f32 %v995, 0.0
    %v1086 = vmax.f32 %v1000, 0.0
    %v1087 = vmax.f32 %v1003, 0.0
    %v1088 = vmax.f32 %v1008, 0.0
    %v1089 = vmax.f32 %v1011, 0.0
    %v1090 = vmax.f32 %v1016, 0.0
    %v1091 = vmax.f32 %v1019, 0.0
    %v1092 = vmax.f32 %v1024, 0.0
    %v1093 = vmax.f32 %v1027, 0.0
    %v1094 = vld [vmem:[%s5] sm:$0x1]
    %v1095 = vpack.c.bf16 %v1031, %v1030
    %v1096 = vpack.c.bf16 %v1033, %v1032
    %v1097 = vpack.c.bf16 %v1035, %v1034
    %v1098 = vpack.c.bf16 %v1037, %v1036
    %v1099 = vpack.c.bf16 %v1039, %v1038
    %v1100 = vpack.c.bf16 %v1041, %v1040
    %v1101 = vpack.c.bf16 %v1043, %v1042
    %v1102 = vpack.c.bf16 %v1045, %v1044
    %v1103 = vpack.c.bf16 %v1047, %v1046
    %v1104 = vpack.c.bf16 %v1049, %v1048
    %v1105 = vpack.c.bf16 %v1051, %v1050
    %v1106 = vpack.c.bf16 %v1053, %v1052
    %v1107 = vpack.c.bf16 %v1055, %v1054
    %v1108 = vpack.c.bf16 %v1057, %v1056
    %v1109 = vpack.c.bf16 %v1059, %v1058
    %v1110 = vpack.c.bf16 %v1061, %v1060
    %v1111 = vpack.c.bf16 %v1063, %v1062
    %v1112 = vpack.c.bf16 %v1065, %v1064
    %v1113 = vpack.c.bf16 %v1067, %v1066
    %v1114 = vpack.c.bf16 %v1069, %v1068
    %v1115 = vpack.c.bf16 %v1071, %v1070
    %v1116 = vpack.c.bf16 %v1073, %v1072
    %v1117 = vpack.c.bf16 %v1075, %v1074
    %v1118 = vpack.c.bf16 %v1077, %v1076
    %v1119 = vpack.c.bf16 %v1079, %v1078
    %v1120 = vpack.c.bf16 %v1081, %v1080
    %v1121 = vpack.c.bf16 %v1083, %v1082
    %v1122 = vpack.c.bf16 %v1085, %v1084
    %v1123 = vpack.c.bf16 %v1087, %v1086
    %v1124 = vpack.c.bf16 %v1089, %v1088
    %v1125 = vpack.c.bf16 %v1091, %v1090
    %v1126 = vpack.c.bf16 %v1093, %v1092
    %v1127 = vld [vmem:[%s6] sm:$0x3]
    %1129 = vset.pattern.permute.xlu0 0
    %1130 = vperm.xlu0 %1129, %v1127
    %v1131 = vpop.permute.xlu0 %1130
    %v1134 = vsel %vm644, %v1094, 0
    %v1137 = vsel %vm644, %v1095, 0
    %v1140 = vsel %vm644, %v1096, 0
    %v1143 = vsel %vm644, %v1097, 0
    %v1146 = vsel %vm644, %v1098, 0
    %v1149 = vsel %vm644, %v1099, 0
    %v1152 = vsel %vm644, %v1100, 0
    %v1155 = vsel %vm644, %v1101, 0
    %v1158 = vsel %vm644, %v1102, 0
    %v1161 = vsel %vm644, %v1103, 0
    %v1164 = vsel %vm644, %v1104, 0
    %v1167 = vsel %vm644, %v1105, 0
    %v1170 = vsel %vm644, %v1106, 0
    %v1173 = vsel %vm644, %v1107, 0
    %v1176 = vsel %vm644, %v1108, 0
    %v1179 = vsel %vm644, %v1109, 0
    %v1182 = vsel %vm644, %v1110, 0
    %v1185 = vsel %vm644, %v1111, 0
    %v1188 = vsel %vm644, %v1112, 0
    %v1191 = vsel %vm644, %v1113, 0
    %v1194 = vsel %vm644, %v1114, 0
    %v1197 = vsel %vm644, %v1115, 0
    %v1200 = vsel %vm644, %v1116, 0
    %v1203 = vsel %vm644, %v1117, 0
    %v1206 = vsel %vm644, %v1118, 0
    %v1209 = vsel %vm644, %v1119, 0
    %v1212 = vsel %vm644, %v1120, 0
    %v1215 = vsel %vm644, %v1121, 0
    %v1218 = vsel %vm644, %v1122, 0
    %v1221 = vsel %vm644, %v1123, 0
    %v1224 = vsel %vm644, %v1124, 0
    %v1227 = vsel %vm644, %v1125, 0
    %v1230 = vsel %vm644, %v1126, 0
    %1232 = vmatprep.subr.bf16.mxu0 0
    %1233 = vmatpush1.bf16.xpose.msra.mxu0 %v1137
    %1234 = vmatprep.subr.bf16.mxu0 0
    %1235 = vmatpush1.bf16.xpose.msra.mxu0 %v1140
    %1236 = vmatprep.subr.bf16.mxu0 0
    %1237 = vmatpush1.bf16.xpose.msra.mxu0 %v1143
    %1238 = vmatprep.subr.bf16.mxu0 0
    %1239 = vmatpush1.bf16.xpose.msra.mxu0 %v1146
    %1240 = vmatprep.subr.bf16.mxu0 0
    %1241 = vmatpush1.bf16.xpose.msra.mxu0 %v1149
    %1242 = vmatprep.subr.bf16.mxu0 0
    %1243 = vmatpush1.bf16.xpose.msra.mxu0 %v1152
    %1244 = vmatprep.subr.bf16.mxu0 0
    %1245 = vmatpush1.bf16.xpose.msra.mxu0 %v1155
    %1246 = vmatprep.subr.bf16.mxu0 0
    %1247 = vmatpush1.bf16.xpose.msra.mxu0 %v1158
    %1248 = vmatprep.subr.bf16.mxu0 0
    %1249 = vmatpush1.bf16.xpose.msra.mxu0 %v1161
    %1250 = vmatprep.subr.bf16.mxu0 0
    %1251 = vmatpush1.bf16.xpose.msra.mxu0 %v1164
    %1252 = vmatprep.subr.bf16.mxu0 0
    %1253 = vmatpush1.bf16.xpose.msra.mxu0 %v1167
    %1254 = vmatprep.subr.bf16.mxu0 0
    %1255 = vmatpush1.bf16.xpose.msra.mxu0 %v1170
    %1256 = vmatprep.subr.bf16.mxu0 0
    %1257 = vmatpush1.bf16.xpose.msra.mxu0 %v1173
    %1258 = vmatprep.subr.bf16.mxu0 0
    %1259 = vmatpush1.bf16.xpose.msra.mxu0 %v1176
    %1260 = vmatprep.subr.bf16.mxu0 0
    %1261 = vmatpush1.bf16.xpose.msra.mxu0 %v1179
    %1262 = vmatprep.subr.bf16.mxu0 0
    %1263 = vmatpush1.bf16.xpose.msra.mxu0 %v1182
    %1264 = vmatprep.mubr.bf16.mxu0 0
    %1265 = vmatmul.mubr.bf16.gmra.mrb[0].mxu0 %v1134
    %v1266 = vpop.f32.mrb[0].mxu0
    %v1267 = vadd.f32 %v1131, %v1266
    %v1268 = vpop.f32.mrb[0].mxu0
    %v1269 = vadd.f32 %v1131, %v1268
    %v1270 = vpop.f32.mrb[0].mxu0
    %v1271 = vpop.f32.mrb[0].mxu0
    %1272 = vdwg.mxu0
    %1273 = vmatprep.subr.bf16.mxu0 0
    %1274 = vmatpush1.bf16.xpose.msra.mxu0 %v1185
    %1275 = vmatprep.subr.bf16.mxu0 0
    %1276 = vmatpush1.bf16.xpose.msra.mxu0 %v1188
    %1277 = vmatprep.subr.bf16.mxu0 0
    %1278 = vmatpush1.bf16.xpose.msra.mxu0 %v1191
    %1279 = vmatprep.subr.bf16.mxu0 0
    %1280 = vmatpush1.bf16.xpose.msra.mxu0 %v1194
    %1281 = vmatprep.subr.bf16.mxu0 0
    %1282 = vmatpush1.bf16.xpose.msra.mxu0 %v1197
    %1283 = vmatprep.subr.bf16.mxu0 0
    %1284 = vmatpush1.bf16.xpose.msra.mxu0 %v1200
    %1285 = vmatprep.subr.bf16.mxu0 0
    %1286 = vmatpush1.bf16.xpose.msra.mxu0 %v1203
    %1287 = vmatprep.subr.bf16.mxu0 0
    %1288 = vmatpush1.bf16.xpose.msra.mxu0 %v1206
    %1289 = vmatprep.subr.bf16.mxu0 0
    %1290 = vmatpush1.bf16.xpose.msra.mxu0 %v1209
    %1291 = vmatprep.subr.bf16.mxu0 0
    %1292 = vmatpush1.bf16.xpose.msra.mxu0 %v1212
    %1293 = vmatprep.subr.bf16.mxu0 0
    %1294 = vmatpush1.bf16.xpose.msra.mxu0 %v1215
    %1295 = vmatprep.subr.bf16.mxu0 0
    %1296 = vmatpush1.bf16.xpose.msra.mxu0 %v1218
    %1297 = vmatprep.subr.bf16.mxu0 0
    %1298 = vmatpush1.bf16.xpose.msra.mxu0 %v1221
    %1299 = vmatprep.subr.bf16.mxu0 0
    %1300 = vmatpush1.bf16.xpose.msra.mxu0 %v1224
    %1301 = vmatprep.subr.bf16.mxu0 0
    %1302 = vmatpush1.bf16.xpose.msra.mxu0 %v1227
    %1303 = vmatprep.subr.bf16.mxu0 0
    %1304 = vmatpush1.bf16.xpose.msra.mxu0 %v1230
    %1305 = vmatprep.mubr.bf16.mxu0 0
    %1306 = vmatmul.mubr.bf16.gmra.mrb[0].mxu0 %v1134
    %v1307 = vpop.f32.mrb[0].mxu0
    %v1308 = vadd.f32 %v1131, %v1307
    %v1309 = vpop.f32.mrb[0].mxu0
    %v1310 = vadd.f32 %v1131, %v1309
    %v1311 = vpop.f32.mrb[0].mxu0
    %v1312 = vpop.f32.mrb[0].mxu0
    %1313 = vdwg.mxu0
    %v1314 = vmul.f32 %v1267, 0.5
    %v1315 = vmul.f32 %v1269, 0.5
    %v1316 = vmul.f32 %v1308, 0.5
    %v1317 = vmul.f32 %v1310, 0.5
    %v1318 = vtanh.pop %v1314
    %v1319 = vtanh.pop %v1315
    %v1320 = vtanh.pop %v1316
    %v1321 = vtanh.pop %v1317
    %v1322 = vmul.f32 %v1318, 0.5
    %v1323 = vmul.f32 %v1319, 0.5
    %v1324 = vmul.f32 %v1320, 0.5
    %v1325 = vmul.f32 %v1321, 0.5
    %v1326 = vadd.f32 %v1322, 0.5
    %v1327 = vadd.f32 %v1323, 0.5
    %v1328 = vadd.f32 %v1324, 0.5
    %v1329 = vadd.f32 %v1325, 0.5
    %v1334 = vcombine.low %v1326, %v1327
    %v1335 = vcombine.low %v1328, %v1329
    %v1337 = vunpack.c.l.s4 1983009808
    %v1338 = vunpack.c.0.s8 %v1337
    %v1339 = vlaneseq
    %v1340 = vshrl.u32 %v1339, 7
    %v1341 = vsub.s32 %v1338, %v1340
    %v1342 = vrot.slane %v1334, %v1341
    %v1344 = vunpack.c.l.s4 1983009808
    %v1345 = vunpack.c.0.s8 %v1344
    %v1346 = vlaneseq
    %v1347 = vshrl.u32 %v1346, 7
    %v1348 = vsub.s32 %v1345, %v1347
    %v1349 = vrot.slane %v1335, %v1348
    %v1350 = vcombine.low %v1342, %v1349
    %1352 = vst [vmem:[#allocation2] sm:$0xff] %v1350
    // Predicated region
    $region30: #{tpu_custom_call.1} parent=1 // pred_check
      _
    $region31: #{tpu_custom_call.1} parent=1 // pred_check_branch
      %1354 = sbr.rel (0) target = $region33
    $region32: #{tpu_custom_call.1} parent=1 // pred_region
      %s1356 = ssub.s32 128, 128
      %1357 = vsyncadd [#allocation3], %s1356
      %s1359 = sshll.u32 [#allocation2], 4
      %s1360 = int_to_ptr.vmem [resolvable:$true] %s1359
      %1362 = dma.vmem_to_hbm [thread:$0]  %s1360, 128, %s7, [#allocation3]
    $region33: #{tpu_custom_call.1} parent=1 // pred_fallthru
      _
    // Predicated region
    $region34: #{tpu_custom_call.1} parent=1 // pred_check
      _
    $region35: #{tpu_custom_call.1} parent=1 // pred_check_branch
      %1364 = sbr.rel (0) target = $region37
    $region36: #{tpu_custom_call.1} parent=1 // pred_region
      %1365 = dma.done [#allocation3], 128
    $region37: #{tpu_custom_call.1} parent=1 // pred_fallthru
      _
    %1366 = vsyncpa [#allocation3], 1

// kernel: tpu_custom_call.1
$region0: #{tpu_custom_call.1}
  #allocation0 [shape = 'u32[]', space=smem, size = 0x4, offset = 0x4, fixed_abs, tag = 'smem constant byte address 0x4 - core index']
  #allocation1 [shape = 'u32[144,128]{1,0:T(1,128)}', space=vmem, size = 0x12000, scoped, tag = 'internal scratch']
  %s0 = inlined_call_operand.vmem [shape: f32[512,16], index: 0, kind: input, shape index: {}]
  %s1 = inlined_call_operand.vmem [shape: bf16[16,32], index: 1, kind: input, shape index: {}]
  %s2 = inlined_call_operand.vmem [shape: f32[1,32], index: 2, kind: input, shape index: {}]
  %s3 = inlined_call_operand.vmem [shape: bf16[32,32], index: 3, kind: input, shape index: {}]
  %s4 = inlined_call_operand.vmem [shape: f32[1,32], index: 4, kind: input, shape index: {}]
  %s5 = inlined_call_operand.vmem [shape: bf16[2,32], index: 5, kind: input, shape index: {}]
  %s6 = inlined_call_operand.vmem [shape: f32[2,1], index: 6, kind: input, shape index: {}]
  %s7 = inlined_call_operand.hbm [shape: f32[2,512], index: 7, kind: output, shape index: {}]
  %s8 = sld [smem:[#allocation0]]
  $region38: #{tpu_custom_call.1} parent=0
    _
  %s10 = ssub.s32 1, %s8
  %s11 = scalar_select 0, %s10, %s8
  $region1: #{tpu_custom_call.1} parent=0
    #allocation2 [shape = 'u8[4096]{0}', space=vmem, size = 0x1000, scoped, tag = 'output window, operand 0, single buffered']
    #allocation3 [shape = 's32[1]{0}', space=sflag, size = 0x4, scoped, tag = 'scoped memory for tpu_custom_call.1']
    %12 = vsyncpa [#allocation3], 0
    // Predicated region
    $region2: #{tpu_custom_call.1} parent=1 // pred_check
      _
    $region3: #{tpu_custom_call.1} parent=1 // pred_check_branch
      %14 = sbr.rel (0) target = $region5
    $region4: #{tpu_custom_call.1} parent=1 // pred_region
      _
    $region5: #{tpu_custom_call.1} parent=1 // pred_fallthru
      _
    // Predicated region
    $region6: #{tpu_custom_call.1} parent=1 // pred_check
      _
    $region7: #{tpu_custom_call.1} parent=1 // pred_check_branch
      %16 = sbr.rel (0) target = $region9
    $region8: #{tpu_custom_call.1} parent=1 // pred_region
      _
    $region9: #{tpu_custom_call.1} parent=1 // pred_fallthru
      _
    // Predicated region
    $region10: #{tpu_custom_call.1} parent=1 // pred_check
      _
    $region11: #{tpu_custom_call.1} parent=1 // pred_check_branch
      %18 = sbr.rel (0) target = $region13
    $region12: #{tpu_custom_call.1} parent=1 // pred_region
      _
    $region13: #{tpu_custom_call.1} parent=1 // pred_fallthru
      _
    // Predicated region
    $region14: #{tpu_custom_call.1} parent=1 // pred_check
      _
    $region15: #{tpu_custom_call.1} parent=1 // pred_check_branch
      %20 = sbr.rel (0) target = $region17
    $region16: #{tpu_custom_call.1} parent=1 // pred_region
      _
    $region17: #{tpu_custom_call.1} parent=1 // pred_fallthru
      _
    // Predicated region
    $region18: #{tpu_custom_call.1} parent=1 // pred_check
      _
    $region19: #{tpu_custom_call.1} parent=1 // pred_check_branch
      %22 = sbr.rel (0) target = $region21
    $region20: #{tpu_custom_call.1} parent=1 // pred_region
      _
    $region21: #{tpu_custom_call.1} parent=1 // pred_fallthru
      _
    // Predicated region
    $region22: #{tpu_custom_call.1} parent=1 // pred_check
      _
    $region23: #{tpu_custom_call.1} parent=1 // pred_check_branch
      %24 = sbr.rel (0) target = $region25
    $region24: #{tpu_custom_call.1} parent=1 // pred_region
      _
    $region25: #{tpu_custom_call.1} parent=1 // pred_fallthru
      _
    // Predicated region
    $region26: #{tpu_custom_call.1} parent=1 // pred_check
      _
    $region27: #{tpu_custom_call.1} parent=1 // pred_check_branch
      %26 = sbr.rel (0) target = $region29
    $region28: #{tpu_custom_call.1} parent=1 // pred_region
      _
    $region29: #{tpu_custom_call.1} parent=1 // pred_fallthru
      _
    %v28 = vld [vmem:[%s0] sm:$0xff]
    %v29 = vld [vmem:[%s0 + $0x8] sm:$0xff]
    %v30 = vld [vmem:[%s0 + $0x10] sm:$0xff]
    %v31 = vld [vmem:[%s0 + $0x18] sm:$0xff]
    %v32 = vld [vmem:[%s0 + $0x20] sm:$0xff]
    %v33 = vld [vmem:[%s0 + $0x28] sm:$0xff]
    %v34 = vld [vmem:[%s0 + $0x30] sm:$0xff]
    %v35 = vld [vmem:[%s0 + $0x38] sm:$0xff]
    %v36 = vld [vmem:[%s0 + $0x40] sm:$0xff]
    %v37 = vld [vmem:[%s0 + $0x48] sm:$0xff]
    %v38 = vld [vmem:[%s0 + $0x50] sm:$0xff]
    %v39 = vld [vmem:[%s0 + $0x58] sm:$0xff]
    %v40 = vld [vmem:[%s0 + $0x60] sm:$0xff]
    %v41 = vld [vmem:[%s0 + $0x68] sm:$0xff]
    %v42 = vld [vmem:[%s0 + $0x70] sm:$0xff]
    %v43 = vld [vmem:[%s0 + $0x78] sm:$0xff]
    %v44 = vld [vmem:[%s0 + $0x80] sm:$0xff]
    %v45 = vld [vmem:[%s0 + $0x88] sm:$0xff]
    %v46 = vld [vmem:[%s0 + $0x90] sm:$0xff]
    %v47 = vld [vmem:[%s0 + $0x98] sm:$0xff]
    %v48 = vld [vmem:[%s0 + $0xa0] sm:$0xff]
    %v49 = vld [vmem:[%s0 + $0xa8] sm:$0xff]
    %v50 = vld [vmem:[%s0 + $0xb0] sm:$0xff]
    %v51 = vld [vmem:[%s0 + $0xb8] sm:$0xff]
    %v52 = vld [vmem:[%s0 + $0xc0] sm:$0xff]
    %v53 = vld [vmem:[%s0 + $0xc8] sm:$0xff]
    %v54 = vld [vmem:[%s0 + $0xd0] sm:$0xff]
    %v55 = vld [vmem:[%s0 + $0xd8] sm:$0xff]
    %v56 = vld [vmem:[%s0 + $0xe0] sm:$0xff]
    %v57 = vld [vmem:[%s0 + $0xe8] sm:$0xff]
    %v58 = vld [vmem:[%s0 + $0xf0] sm:$0xff]
    %v59 = vld [vmem:[%s0 + $0xf8] sm:$0xff]
    %v60 = vld [vmem:[%s0 + $0x100] sm:$0xff]
    %v61 = vld [vmem:[%s0 + $0x108] sm:$0xff]
    %v62 = vld [vmem:[%s0 + $0x110] sm:$0xff]
    %v63 = vld [vmem:[%s0 + $0x118] sm:$0xff]
    %v64 = vld [vmem:[%s0 + $0x120] sm:$0xff]
    %v65 = vld [vmem:[%s0 + $0x128] sm:$0xff]
    %v66 = vld [vmem:[%s0 + $0x130] sm:$0xff]
    %v67 = vld [vmem:[%s0 + $0x138] sm:$0xff]
    %v68 = vld [vmem:[%s0 + $0x140] sm:$0xff]
    %v69 = vld [vmem:[%s0 + $0x148] sm:$0xff]
    %v70 = vld [vmem:[%s0 + $0x150] sm:$0xff]
    %v71 = vld [vmem:[%s0 + $0x158] sm:$0xff]
    %v72 = vld [vmem:[%s0 + $0x160] sm:$0xff]
    %v73 = vld [vmem:[%s0 + $0x168] sm:$0xff]
    %v74 = vld [vmem:[%s0 + $0x170] sm:$0xff]
    %v75 = vld [vmem:[%s0 + $0x178] sm:$0xff]
    %v76 = vld [vmem:[%s0 + $0x180] sm:$0xff]
    %v77 = vld [vmem:[%s0 + $0x188] sm:$0xff]
    %v78 = vld [vmem:[%s0 + $0x190] sm:$0xff]
    %v79 = vld [vmem:[%s0 + $0x198] sm:$0xff]
    %v80 = vld [vmem:[%s0 + $0x1a0] sm:$0xff]
    %v81 = vld [vmem:[%s0 + $0x1a8] sm:$0xff]
    %v82 = vld [vmem:[%s0 + $0x1b0] sm:$0xff]
    %v83 = vld [vmem:[%s0 + $0x1b8] sm:$0xff]
    %v84 = vld [vmem:[%s0 + $0x1c0] sm:$0xff]
    %v85 = vld [vmem:[%s0 + $0x1c8] sm:$0xff]
    %v86 = vld [vmem:[%s0 + $0x1d0] sm:$0xff]
    %v87 = vld [vmem:[%s0 + $0x1d8] sm:$0xff]
    %v88 = vld [vmem:[%s0 + $0x1e0] sm:$0xff]
    %v89 = vld [vmem:[%s0 + $0x1e8] sm:$0xff]
    %v90 = vld [vmem:[%s0 + $0x1f0] sm:$0xff]
    %v91 = vld [vmem:[%s0 + $0x1f8] sm:$0xff]
    %v92 = vpack.c.bf16 %v29, %v28
    %v93 = vpack.c.bf16 %v31, %v30
    %v94 = vpack.c.bf16 %v33, %v32
    %v95 = vpack.c.bf16 %v35, %v34
    %v96 = vpack.c.bf16 %v37, %v36
    %v97 = vpack.c.bf16 %v39, %v38
    %v98 = vpack.c.bf16 %v41, %v40
    %v99 = vpack.c.bf16 %v43, %v42
    %v100 = vpack.c.bf16 %v45, %v44
    %v101 = vpack.c.bf16 %v47, %v46
    %v102 = vpack.c.bf16 %v49, %v48
    %v103 = vpack.c.bf16 %v51, %v50
    %v104 = vpack.c.bf16 %v53, %v52
    %v105 = vpack.c.bf16 %v55, %v54
    %v106 = vpack.c.bf16 %v57, %v56
    %v107 = vpack.c.bf16 %v59, %v58
    %v108 = vpack.c.bf16 %v61, %v60
    %v109 = vpack.c.bf16 %v63, %v62
    %v110 = vpack.c.bf16 %v65, %v64
    %v111 = vpack.c.bf16 %v67, %v66
    %v112 = vpack.c.bf16 %v69, %v68
    %v113 = vpack.c.bf16 %v71, %v70
    %v114 = vpack.c.bf16 %v73, %v72
    %v115 = vpack.c.bf16 %v75, %v74
    %v116 = vpack.c.bf16 %v77, %v76
    %v117 = vpack.c.bf16 %v79, %v78
    %v118 = vpack.c.bf16 %v81, %v80
    %v119 = vpack.c.bf16 %v83, %v82
    %v120 = vpack.c.bf16 %v85, %v84
    %v121 = vpack.c.bf16 %v87, %v86
    %v122 = vpack.c.bf16 %v89, %v88
    %v123 = vpack.c.bf16 %v91, %v90
    %v124 = vld [vmem:[%s1] sm:$0xf]
    %v125 = vld [vmem:[%s1 + $0x4] sm:$0xf]
    %v126 = vld [vmem:[%s2] sm:$0x1]
    %v128 = vlaneseq
    %v129 = vshrl.u32 %v128, 7
    %v130 = vsub.s32 0, %v129
    %v131 = vrot.slane %v126, %v130
    %v135 = vunpack.c.l.b16 %v124
    %v136 = vunpack.c.l.b16 %v125
    %v137 = vpack.c.b16 %v136, %v135
    %vm139 = vcmask 130048
    %v141 = vsel %vm139, %v92, 0
    %v144 = vsel %vm139, %v93, 0
    %v147 = vsel %vm139, %v94, 0
    %v150 = vsel %vm139, %v95, 0
    %v153 = vsel %vm139, %v96, 0
    %v156 = vsel %vm139, %v97, 0
    %v159 = vsel %vm139, %v98, 0
    %v162 = vsel %vm139, %v99, 0
    %v165 = vsel %vm139, %v100, 0
    %v168 = vsel %vm139, %v101, 0
    %v171 = vsel %vm139, %v102, 0
    %v174 = vsel %vm139, %v103, 0
    %v177 = vsel %vm139, %v104, 0
    %v180 = vsel %vm139, %v105, 0
    %v183 = vsel %vm139, %v106, 0
    %v186 = vsel %vm139, %v107, 0
    %v189 = vsel %vm139, %v108, 0
    %v192 = vsel %vm139, %v109, 0
    %v195 = vsel %vm139, %v110, 0
    %v198 = vsel %vm139, %v111, 0
    %v201 = vsel %vm139, %v112, 0
    %v204 = vsel %vm139, %v113, 0
    %v207 = vsel %vm139, %v114, 0
    %v210 = vsel %vm139, %v115, 0
    %v213 = vsel %vm139, %v116, 0
    %v216 = vsel %vm139, %v117, 0
    %v219 = vsel %vm139, %v118, 0
    %v222 = vsel %vm139, %v119, 0
    %v225 = vsel %vm139, %v120, 0
    %v228 = vsel %vm139, %v121, 0
    %v231 = vsel %vm139, %v122, 0
    %v234 = vsel %vm139, %v123, 0
    %236 = vmatprep.subr.bf16.mxu0 0
    %237 = vmatpush1.bf16.msra.mxu0 %v137
    %238 = vmatprep.subr.bf16.mxu0 0
    %239 = vmatpush1.bf16.msra.mxu0 0
    %240 = vmatprep.subr.bf16.mxu0 0
    %241 = vmatpush1.bf16.msra.mxu0 0
    %242 = vmatprep.subr.bf16.mxu0 0
    %243 = vmatpush1.bf16.msra.mxu0 0
    %244 = vmatprep.subr.bf16.mxu0 0
    %245 = vmatpush1.bf16.msra.mxu0 0
    %246 = vmatprep.subr.bf16.mxu0 0
    %247 = vmatpush1.bf16.msra.mxu0 0
    %248 = vmatprep.subr.bf16.mxu0 0
    %249 = vmatpush1.bf16.msra.mxu0 0
    %250 = vmatprep.subr.bf16.mxu0 0
    %251 = vmatpush1.bf16.msra.mxu0 0
    %252 = vmatprep.subr.bf16.mxu0 0
    %253 = vmatpush1.bf16.msra.mxu0 0
    %254 = vmatprep.subr.bf16.mxu0 0
    %255 = vmatpush1.bf16.msra.mxu0 0
    %256 = vmatprep.subr.bf16.mxu0 0
    %257 = vmatpush1.bf16.msra.mxu0 0
    %258 = vmatprep.subr.bf16.mxu0 0
    %259 = vmatpush1.bf16.msra.mxu0 0
    %260 = vmatprep.subr.bf16.mxu0 0
    %261 = vmatpush1.bf16.msra.mxu0 0
    %262 = vmatprep.subr.bf16.mxu0 0
    %263 = vmatpush1.bf16.msra.mxu0 0
    %264 = vmatprep.subr.bf16.mxu0 0
    %265 = vmatpush1.bf16.msra.mxu0 0
    %266 = vmatprep.subr.bf16.mxu0 0
    %267 = vmatpush1.bf16.msra.mxu0 0
    %268 = vmatprep.mubr.bf16.mxu0 0
    %269 = vmatmul.mubr.bf16.gmra.mrb[0].mxu0 %v141
    %v270 = vpop.f32.mrb[0].mxu0
    %v271 = vadd.f32 %v131, %v270
    %v272 = vpop.f32.mrb[0].mxu0
    %v273 = vpop.f32.mrb[0].mxu0
    %v274 = vadd.f32 %v131, %v273
    %v275 = vpop.f32.mrb[0].mxu0
    %276 = vmatprep.mubr.bf16.mxu0 0
    %277 = vmatmul.mubr.bf16.gmra.mrb[0].mxu0 %v144
    %v278 = vpop.f32.mrb[0].mxu0
    %v279 = vadd.f32 %v131, %v278
    %v280 = vpop.f32.mrb[0].mxu0
    %v281 = vpop.f32.mrb[0].mxu0
    %v282 = vadd.f32 %v131, %v281
    %v283 = vpop.f32.mrb[0].mxu0
    %284 = vmatprep.mubr.bf16.mxu0 0
    %285 = vmatmul.mubr.bf16.gmra.mrb[0].mxu0 %v147
    %v286 = vpop.f32.mrb[0].mxu0
    %v287 = vadd.f32 %v131, %v286
    %v288 = vpop.f32.mrb[0].mxu0
    %v289 = vpop.f32.mrb[0].mxu0
    %v290 = vadd.f32 %v131, %v289
    %v291 = vpop.f32.mrb[0].mxu0
    %292 = vmatprep.mubr.bf16.mxu0 0
    %293 = vmatmul.mubr.bf16.gmra.mrb[0].mxu0 %v150
    %v294 = vpop.f32.mrb[0].mxu0
    %v295 = vadd.f32 %v131, %v294
    %v296 = vpop.f32.mrb[0].mxu0
    %v297 = vpop.f32.mrb[0].mxu0
    %v298 = vadd.f32 %v131, %v297
    %v299 = vpop.f32.mrb[0].mxu0
    %300 = vmatprep.mubr.bf16.mxu0 0
    %301 = vmatmul.mubr.bf16.gmra.mrb[0].mxu0 %v153
    %v302 = vpop.f32.mrb[0].mxu0
    %v303 = vadd.f32 %v131, %v302
    %v304 = vpop.f32.mrb[0].mxu0
    %v305 = vpop.f32.mrb[0].mxu0
    %v306 = vadd.f32 %v131, %v305
    %v307 = vpop.f32.mrb[0].mxu0
    %308 = vmatprep.mubr.bf16.mxu0 0
    %309 = vmatmul.mubr.bf16.gmra.mrb[0].mxu0 %v156
    %v310 = vpop.f32.mrb[0].mxu0
    %v311 = vadd.f32 %v131, %v310
    %v312 = vpop.f32.mrb[0].mxu0
    %v313 = vpop.f32.mrb[0].mxu0
    %v314 = vadd.f32 %v131, %v313
    %v315 = vpop.f32.mrb[0].mxu0
    %316 = vmatprep.mubr.bf16.mxu0 0
    %317 = vmatmul.mubr.bf16.gmra.mrb[0].mxu0 %v159
    %v318 = vpop.f32.mrb[0].mxu0
    %v319 = vadd.f32 %v131, %v318
    %v320 = vpop.f32.mrb[0].mxu0
    %v321 = vpop.f32.mrb[0].mxu0
    %v322 = vadd.f32 %v131, %v321
    %v323 = vpop.f32.mrb[0].mxu0
    %324 = vmatprep.mubr.bf16.mxu0 0
    %325 = vmatmul.mubr.bf16.gmra.mrb[0].mxu0 %v162
    %v326 = vpop.f32.mrb[0].mxu0
    %v327 = vadd.f32 %v131, %v326
    %v328 = vpop.f32.mrb[0].mxu0
    %v329 = vpop.f32.mrb[0].mxu0
    %v330 = vadd.f32 %v131, %v329
    %v331 = vpop.f32.mrb[0].mxu0
    %332 = vmatprep.mubr.bf16.mxu0 0
    %333 = vmatmul.mubr.bf16.gmra.mrb[0].mxu0 %v165
    %v334 = vpop.f32.mrb[0].mxu0
    %v335 = vadd.f32 %v131, %v334
    %v336 = vpop.f32.mrb[0].mxu0
    %v337 = vpop.f32.mrb[0].mxu0
    %v338 = vadd.f32 %v131, %v337
    %v339 = vpop.f32.mrb[0].mxu0
    %340 = vmatprep.mubr.bf16.mxu0 0
    %341 = vmatmul.mubr.bf16.gmra.mrb[0].mxu0 %v168
    %v342 = vpop.f32.mrb[0].mxu0
    %v343 = vadd.f32 %v131, %v342
    %v344 = vpop.f32.mrb[0].mxu0
    %v345 = vpop.f32.mrb[0].mxu0
    %v346 = vadd.f32 %v131, %v345
    %v347 = vpop.f32.mrb[0].mxu0
    %348 = vmatprep.mubr.bf16.mxu0 0
    %349 = vmatmul.mubr.bf16.gmra.mrb[0].mxu0 %v171
    %v350 = vpop.f32.mrb[0].mxu0
    %v351 = vadd.f32 %v131, %v350
    %v352 = vpop.f32.mrb[0].mxu0
    %v353 = vpop.f32.mrb[0].mxu0
    %v354 = vadd.f32 %v131, %v353
    %v355 = vpop.f32.mrb[0].mxu0
    %356 = vmatprep.mubr.bf16.mxu0 0
    %357 = vmatmul.mubr.bf16.gmra.mrb[0].mxu0 %v174
    %v358 = vpop.f32.mrb[0].mxu0
    %v359 = vadd.f32 %v131, %v358
    %v360 = vpop.f32.mrb[0].mxu0
    %v361 = vpop.f32.mrb[0].mxu0
    %v362 = vadd.f32 %v131, %v361
    %v363 = vpop.f32.mrb[0].mxu0
    %364 = vmatprep.mubr.bf16.mxu0 0
    %365 = vmatmul.mubr.bf16.gmra.mrb[0].mxu0 %v177
    %v366 = vpop.f32.mrb[0].mxu0
    %v367 = vadd.f32 %v131, %v366
    %v368 = vpop.f32.mrb[0].mxu0
    %v369 = vpop.f32.mrb[0].mxu0
    %v370 = vadd.f32 %v131, %v369
    %v371 = vpop.f32.mrb[0].mxu0
    %372 = vmatprep.mubr.bf16.mxu0 0
    %373 = vmatmul.mubr.bf16.gmra.mrb[0].mxu0 %v180
    %v374 = vpop.f32.mrb[0].mxu0
    %v375 = vadd.f32 %v131, %v374
    %v376 = vpop.f32.mrb[0].mxu0
    %v377 = vpop.f32.mrb[0].mxu0
    %v378 = vadd.f32 %v131, %v377
    %v379 = vpop.f32.mrb[0].mxu0
    %380 = vmatprep.mubr.bf16.mxu0 0
    %381 = vmatmul.mubr.bf16.gmra.mrb[0].mxu0 %v183
    %v382 = vpop.f32.mrb[0].mxu0
    %v383 = vadd.f32 %v131, %v382
    %v384 = vpop.f32.mrb[0].mxu0
    %v385 = vpop.f32.mrb[0].mxu0
    %v386 = vadd.f32 %v131, %v385
    %v387 = vpop.f32.mrb[0].mxu0
    %388 = vmatprep.mubr.bf16.mxu0 0
    %389 = vmatmul.mubr.bf16.gmra.mrb[0].mxu0 %v186
    %v390 = vpop.f32.mrb[0].mxu0
    %v391 = vadd.f32 %v131, %v390
    %v392 = vpop.f32.mrb[0].mxu0
    %v393 = vpop.f32.mrb[0].mxu0
    %v394 = vadd.f32 %v131, %v393
    %v395 = vpop.f32.mrb[0].mxu0
    %396 = vmatprep.mubr.bf16.mxu0 0
    %397 = vmatmul.mubr.bf16.gmra.mrb[0].mxu0 %v189
    %v398 = vpop.f32.mrb[0].mxu0
    %v399 = vadd.f32 %v131, %v398
    %v400 = vpop.f32.mrb[0].mxu0
    %v401 = vpop.f32.mrb[0].mxu0
    %v402 = vadd.f32 %v131, %v401
    %v403 = vpop.f32.mrb[0].mxu0
    %404 = vmatprep.mubr.bf16.mxu0 0
    %405 = vmatmul.mubr.bf16.gmra.mrb[0].mxu0 %v192
    %v406 = vpop.f32.mrb[0].mxu0
    %v407 = vadd.f32 %v131, %v406
    %v408 = vpop.f32.mrb[0].mxu0
    %v409 = vpop.f32.mrb[0].mxu0
    %v410 = vadd.f32 %v131, %v409
    %v411 = vpop.f32.mrb[0].mxu0
    %412 = vmatprep.mubr.bf16.mxu0 0
    %413 = vmatmul.mubr.bf16.gmra.mrb[0].mxu0 %v195
    %v414 = vpop.f32.mrb[0].mxu0
    %v415 = vadd.f32 %v131, %v414
    %v416 = vpop.f32.mrb[0].mxu0
    %v417 = vpop.f32.mrb[0].mxu0
    %v418 = vadd.f32 %v131, %v417
    %v419 = vpop.f32.mrb[0].mxu0
    %420 = vmatprep.mubr.bf16.mxu0 0
    %421 = vmatmul.mubr.bf16.gmra.mrb[0].mxu0 %v198
    %v422 = vpop.f32.mrb[0].mxu0
    %v423 = vadd.f32 %v131, %v422
    %v424 = vpop.f32.mrb[0].mxu0
    %v425 = vpop.f32.mrb[0].mxu0
    %v426 = vadd.f32 %v131, %v425
    %v427 = vpop.f32.mrb[0].mxu0
    %428 = vmatprep.mubr.bf16.mxu0 0
    %429 = vmatmul.mubr.bf16.gmra.mrb[0].mxu0 %v201
    %v430 = vpop.f32.mrb[0].mxu0
    %v431 = vadd.f32 %v131, %v430
    %v432 = vpop.f32.mrb[0].mxu0
    %v433 = vpop.f32.mrb[0].mxu0
    %v434 = vadd.f32 %v131, %v433
    %v435 = vpop.f32.mrb[0].mxu0
    %436 = vmatprep.mubr.bf16.mxu0 0
    %437 = vmatmul.mubr.bf16.gmra.mrb[0].mxu0 %v204
    %v438 = vpop.f32.mrb[0].mxu0
    %v439 = vadd.f32 %v131, %v438
    %v440 = vpop.f32.mrb[0].mxu0
    %v441 = vpop.f32.mrb[0].mxu0
    %v442 = vadd.f32 %v131, %v441
    %v443 = vpop.f32.mrb[0].mxu0
    %444 = vmatprep.mubr.bf16.mxu0 0
    %445 = vmatmul.mubr.bf16.gmra.mrb[0].mxu0 %v207
    %v446 = vpop.f32.mrb[0].mxu0
    %v447 = vadd.f32 %v131, %v446
    %v448 = vpop.f32.mrb[0].mxu0
    %v449 = vpop.f32.mrb[0].mxu0
    %v450 = vadd.f32 %v131, %v449
    %v451 = vpop.f32.mrb[0].mxu0
    %452 = vmatprep.mubr.bf16.mxu0 0
    %453 = vmatmul.mubr.bf16.gmra.mrb[0].mxu0 %v210
    %v454 = vpop.f32.mrb[0].mxu0
    %v455 = vadd.f32 %v131, %v454
    %v456 = vpop.f32.mrb[0].mxu0
    %v457 = vpop.f32.mrb[0].mxu0
    %v458 = vadd.f32 %v131, %v457
    %v459 = vpop.f32.mrb[0].mxu0
    %460 = vmatprep.mubr.bf16.mxu0 0
    %461 = vmatmul.mubr.bf16.gmra.mrb[0].mxu0 %v213
    %v462 = vpop.f32.mrb[0].mxu0
    %v463 = vadd.f32 %v131, %v462
    %v464 = vpop.f32.mrb[0].mxu0
    %v465 = vpop.f32.mrb[0].mxu0
    %v466 = vadd.f32 %v131, %v465
    %v467 = vpop.f32.mrb[0].mxu0
    %468 = vmatprep.mubr.bf16.mxu0 0
    %469 = vmatmul.mubr.bf16.gmra.mrb[0].mxu0 %v216
    %v470 = vpop.f32.mrb[0].mxu0
    %v471 = vadd.f32 %v131, %v470
    %v472 = vpop.f32.mrb[0].mxu0
    %v473 = vpop.f32.mrb[0].mxu0
    %v474 = vadd.f32 %v131, %v473
    %v475 = vpop.f32.mrb[0].mxu0
    %476 = vmatprep.mubr.bf16.mxu0 0
    %477 = vmatmul.mubr.bf16.gmra.mrb[0].mxu0 %v219
    %v478 = vpop.f32.mrb[0].mxu0
    %v479 = vadd.f32 %v131, %v478
    %v480 = vpop.f32.mrb[0].mxu0
    %v481 = vpop.f32.mrb[0].mxu0
    %v482 = vadd.f32 %v131, %v481
    %v483 = vpop.f32.mrb[0].mxu0
    %484 = vmatprep.mubr.bf16.mxu0 0
    %485 = vmatmul.mubr.bf16.gmra.mrb[0].mxu0 %v222
    %v486 = vpop.f32.mrb[0].mxu0
    %v487 = vadd.f32 %v131, %v486
    %v488 = vpop.f32.mrb[0].mxu0
    %v489 = vpop.f32.mrb[0].mxu0
    %v490 = vadd.f32 %v131, %v489
    %v491 = vpop.f32.mrb[0].mxu0
    %492 = vmatprep.mubr.bf16.mxu0 0
    %493 = vmatmul.mubr.bf16.gmra.mrb[0].mxu0 %v225
    %v494 = vpop.f32.mrb[0].mxu0
    %v495 = vadd.f32 %v131, %v494
    %v496 = vpop.f32.mrb[0].mxu0
    %v497 = vpop.f32.mrb[0].mxu0
    %v498 = vadd.f32 %v131, %v497
    %v499 = vpop.f32.mrb[0].mxu0
    %500 = vmatprep.mubr.bf16.mxu0 0
    %501 = vmatmul.mubr.bf16.gmra.mrb[0].mxu0 %v228
    %v502 = vpop.f32.mrb[0].mxu0
    %v503 = vadd.f32 %v131, %v502
    %v504 = vpop.f32.mrb[0].mxu0
    %v505 = vpop.f32.mrb[0].mxu0
    %v506 = vadd.f32 %v131, %v505
    %v507 = vpop.f32.mrb[0].mxu0
    %508 = vmatprep.mubr.bf16.mxu0 0
    %509 = vmatmul.mubr.bf16.gmra.mrb[0].mxu0 %v231
    %v510 = vpop.f32.mrb[0].mxu0
    %v511 = vadd.f32 %v131, %v510
    %v512 = vpop.f32.mrb[0].mxu0
    %v513 = vpop.f32.mrb[0].mxu0
    %v514 = vadd.f32 %v131, %v513
    %v515 = vpop.f32.mrb[0].mxu0
    %516 = vmatprep.mubr.bf16.mxu0 0
    %517 = vmatmul.mubr.bf16.gmra.mrb[0].mxu0 %v234
    %v518 = vpop.f32.mrb[0].mxu0
    %v519 = vadd.f32 %v131, %v518
    %v520 = vpop.f32.mrb[0].mxu0
    %v521 = vpop.f32.mrb[0].mxu0
    %v522 = vadd.f32 %v131, %v521
    %v523 = vpop.f32.mrb[0].mxu0
    %524 = vdwg.mxu0
    %v525 = vmax.f32 %v271, 0.0
    %v526 = vmax.f32 %v274, 0.0
    %v527 = vmax.f32 %v279, 0.0
    %v528 = vmax.f32 %v282, 0.0
    %v529 = vmax.f32 %v287, 0.0
    %v530 = vmax.f32 %v290, 0.0
    %v531 = vmax.f32 %v295, 0.0
    %v532 = vmax.f32 %v298, 0.0
    %v533 = vmax.f32 %v303, 0.0
    %v534 = vmax.f32 %v306, 0.0
    %v535 = vmax.f32 %v311, 0.0
    %v536 = vmax.f32 %v314, 0.0
    %v537 = vmax.f32 %v319, 0.0
    %v538 = vmax.f32 %v322, 0.0
    %v539 = vmax.f32 %v327, 0.0
    %v540 = vmax.f32 %v330, 0.0
    %v541 = vmax.f32 %v335, 0.0
    %v542 = vmax.f32 %v338, 0.0
    %v543 = vmax.f32 %v343, 0.0
    %v544 = vmax.f32 %v346, 0.0
    %v545 = vmax.f32 %v351, 0.0
    %v546 = vmax.f32 %v354, 0.0
    %v547 = vmax.f32 %v359, 0.0
    %v548 = vmax.f32 %v362, 0.0
    %v549 = vmax.f32 %v367, 0.0
    %v550 = vmax.f32 %v370, 0.0
    %v551 = vmax.f32 %v375, 0.0
    %v552 = vmax.f32 %v378, 0.0
    %v553 = vmax.f32 %v383, 0.0
    %v554 = vmax.f32 %v386, 0.0
    %v555 = vmax.f32 %v391, 0.0
    %v556 = vmax.f32 %v394, 0.0
    %v557 = vmax.f32 %v399, 0.0
    %v558 = vmax.f32 %v402, 0.0
    %v559 = vmax.f32 %v407, 0.0
    %v560 = vmax.f32 %v410, 0.0
    %v561 = vmax.f32 %v415, 0.0
    %v562 = vmax.f32 %v418, 0.0
    %v563 = vmax.f32 %v423, 0.0
    %v564 = vmax.f32 %v426, 0.0
    %v565 = vmax.f32 %v431, 0.0
    %v566 = vmax.f32 %v434, 0.0
    %v567 = vmax.f32 %v439, 0.0
    %v568 = vmax.f32 %v442, 0.0
    %v569 = vmax.f32 %v447, 0.0
    %v570 = vmax.f32 %v450, 0.0
    %v571 = vmax.f32 %v455, 0.0
    %v572 = vmax.f32 %v458, 0.0
    %v573 = vmax.f32 %v463, 0.0
    %v574 = vmax.f32 %v466, 0.0
    %v575 = vmax.f32 %v471, 0.0
    %v576 = vmax.f32 %v474, 0.0
    %v577 = vmax.f32 %v479, 0.0
    %v578 = vmax.f32 %v482, 0.0
    %v579 = vmax.f32 %v487, 0.0
    %v580 = vmax.f32 %v490, 0.0
    %v581 = vmax.f32 %v495, 0.0
    %v582 = vmax.f32 %v498, 0.0
    %v583 = vmax.f32 %v503, 0.0
    %v584 = vmax.f32 %v506, 0.0
    %v585 = vmax.f32 %v511, 0.0
    %v586 = vmax.f32 %v514, 0.0
    %v587 = vmax.f32 %v519, 0.0
    %v588 = vmax.f32 %v522, 0.0
    %v589 = vpack.c.bf16 %v526, %v525
    %v590 = vpack.c.bf16 %v528, %v527
    %v591 = vpack.c.bf16 %v530, %v529
    %v592 = vpack.c.bf16 %v532, %v531
    %v593 = vpack.c.bf16 %v534, %v533
    %v594 = vpack.c.bf16 %v536, %v535
    %v595 = vpack.c.bf16 %v538, %v537
    %v596 = vpack.c.bf16 %v540, %v539
    %v597 = vpack.c.bf16 %v542, %v541
    %v598 = vpack.c.bf16 %v544, %v543
    %v599 = vpack.c.bf16 %v546, %v545
    %v600 = vpack.c.bf16 %v548, %v547
    %v601 = vpack.c.bf16 %v550, %v549
    %v602 = vpack.c.bf16 %v552, %v551
    %v603 = vpack.c.bf16 %v554, %v553
    %v604 = vpack.c.bf16 %v556, %v555
    %v605 = vpack.c.bf16 %v558, %v557
    %v606 = vpack.c.bf16 %v560, %v559
    %v607 = vpack.c.bf16 %v562, %v561
    %v608 = vpack.c.bf16 %v564, %v563
    %v609 = vpack.c.bf16 %v566, %v565
    %v610 = vpack.c.bf16 %v568, %v567
    %v611 = vpack.c.bf16 %v570, %v569
    %v612 = vpack.c.bf16 %v572, %v571
    %v613 = vpack.c.bf16 %v574, %v573
    %v614 = vpack.c.bf16 %v576, %v575
    %v615 = vpack.c.bf16 %v578, %v577
    %v616 = vpack.c.bf16 %v580, %v579
    %v617 = vpack.c.bf16 %v582, %v581
    %v618 = vpack.c.bf16 %v584, %v583
    %v619 = vpack.c.bf16 %v586, %v585
    %v620 = vpack.c.bf16 %v588, %v587
    %v621 = vld [vmem:[%s3] sm:$0xf]
    %v622 = vld [vmem:[%s3 + $0x4] sm:$0xf]
    %v623 = vld [vmem:[%s3 + $0x8] sm:$0xf]
    %v624 = vld [vmem:[%s3 + $0xc] sm:$0xf]
    %v625 = vld [vmem:[%s4] sm:$0x1]
    %v627 = vlaneseq
    %v628 = vshrl.u32 %v627, 7
    %v629 = vsub.s32 0, %v628
    %v630 = vrot.slane %v625, %v629
    %v636 = vunpack.c.l.b16 %v621
    %v637 = vunpack.c.l.b16 %v622
    %v638 = vunpack.c.l.b16 %v623
    %v639 = vunpack.c.l.b16 %v624
    %v640 = vpack.c.b16 %v637, %v636
    %v641 = vpack.c.b16 %v639, %v638
    %vm644 = vcmask 261120
    %v646 = vsel %vm644, %v589, 0
    %v649 = vsel %vm644, %v590, 0
    %v652 = vsel %vm644, %v591, 0
    %v655 = vsel %vm644, %v592, 0
    %v658 = vsel %vm644, %v593, 0
    %v661 = vsel %vm644, %v594, 0
    %v664 = vsel %vm644, %v595, 0
    %v667 = vsel %vm644, %v596, 0
    %v670 = vsel %vm644, %v597, 0
    %v673 = vsel %vm644, %v598, 0
    %v676 = vsel %vm644, %v599, 0
    %v679 = vsel %vm644, %v600, 0
    %v682 = vsel %vm644, %v601, 0
    %v685 = vsel %vm644, %v602, 0
    %v688 = vsel %vm644, %v603, 0
    %v691 = vsel %vm644, %v604, 0
    %v694 = vsel %vm644, %v605, 0
    %v697 = vsel %vm644, %v606, 0
    %v700 = vsel %vm644, %v607, 0
    %v703 = vsel %vm644, %v608, 0
    %v706 = vsel %vm644, %v609, 0
    %v709 = vsel %vm644, %v610, 0
    %v712 = vsel %vm644, %v611, 0
    %v715 = vsel %vm644, %v612, 0
    %v718 = vsel %vm644, %v613, 0
    %v721 = vsel %vm644, %v614, 0
    %v724 = vsel %vm644, %v615, 0
    %v727 = vsel %vm644, %v616, 0
    %v730 = vsel %vm644, %v617, 0
    %v733 = vsel %vm644, %v618, 0
    %v736 = vsel %vm644, %v619, 0
    %v739 = vsel %vm644, %v620, 0
    %741 = vmatprep.subr.bf16.mxu0 0
    %742 = vmatpush1.bf16.msra.mxu0 %v640
    %743 = vmatprep.subr.bf16.mxu0 0
    %744 = vmatpush1.bf16.msra.mxu0 %v641
    %745 = vmatprep.subr.bf16.mxu0 0
    %746 = vmatpush1.bf16.msra.mxu0 0
    %747 = vmatprep.subr.bf16.mxu0 0
    %748 = vmatpush1.bf16.msra.mxu0 0
    %749 = vmatprep.subr.bf16.mxu0 0
    %750 = vmatpush1.bf16.msra.mxu0 0
    %751 = vmatprep.subr.bf16.mxu0 0
    %752 = vmatpush1.bf16.msra.mxu0 0
    %753 = vmatprep.subr.bf16.mxu0 0
    %754 = vmatpush1.bf16.msra.mxu0 0
    %755 = vmatprep.subr.bf16.mxu0 0
    %756 = vmatpush1.bf16.msra.mxu0 0
    %757 = vmatprep.subr.bf16.mxu0 0
    %758 = vmatpush1.bf16.msra.mxu0 0
    %759 = vmatprep.subr.bf16.mxu0 0
    %760 = vmatpush1.bf16.msra.mxu0 0
    %761 = vmatprep.subr.bf16.mxu0 0
    %762 = vmatpush1.bf16.msra.mxu0 0
    %763 = vmatprep.subr.bf16.mxu0 0
    %764 = vmatpush1.bf16.msra.mxu0 0
    %765 = vmatprep.subr.bf16.mxu0 0
    %766 = vmatpush1.bf16.msra.mxu0 0
    %767 = vmatprep.subr.bf16.mxu0 0
    %768 = vmatpush1.bf16.msra.mxu0 0
    %769 = vmatprep.subr.bf16.mxu0 0
    %770 = vmatpush1.bf16.msra.mxu0 0
    %771 = vmatprep.subr.bf16.mxu0 0
    %772 = vmatpush1.bf16.msra.mxu0 0
    %773 = vmatprep.mubr.bf16.mxu0 0
    %774 = vmatmul.mubr.bf16.gmra.mrb[0].mxu0 %v646
    %v775 = vpop.f32.mrb[0].mxu0
    %v776 = vadd.f32 %v630, %v775
    %v777 = vpop.f32.mrb[0].mxu0
    %v778 = vpop.f32.mrb[0].mxu0
    %v779 = vadd.f32 %v630, %v778
    %v780 = vpop.f32.mrb[0].mxu0
    %781 = vmatprep.mubr.bf16.mxu0 0
    %782 = vmatmul.mubr.bf16.gmra.mrb[0].mxu0 %v649
    %v783 = vpop.f32.mrb[0].mxu0
    %v784 = vadd.f32 %v630, %v783
    %v785 = vpop.f32.mrb[0].mxu0
    %v786 = vpop.f32.mrb[0].mxu0
    %v787 = vadd.f32 %v630, %v786
    %v788 = vpop.f32.mrb[0].mxu0
    %789 = vmatprep.mubr.bf16.mxu0 0
    %790 = vmatmul.mubr.bf16.gmra.mrb[0].mxu0 %v652
    %v791 = vpop.f32.mrb[0].mxu0
    %v792 = vadd.f32 %v630, %v791
    %v793 = vpop.f32.mrb[0].mxu0
    %v794 = vpop.f32.mrb[0].mxu0
    %v795 = vadd.f32 %v630, %v794
    %v796 = vpop.f32.mrb[0].mxu0
    %797 = vmatprep.mubr.bf16.mxu0 0
    %798 = vmatmul.mubr.bf16.gmra.mrb[0].mxu0 %v655
    %v799 = vpop.f32.mrb[0].mxu0
    %v800 = vadd.f32 %v630, %v799
    %v801 = vpop.f32.mrb[0].mxu0
    %v802 = vpop.f32.mrb[0].mxu0
    %v803 = vadd.f32 %v630, %v802
    %v804 = vpop.f32.mrb[0].mxu0
    %805 = vmatprep.mubr.bf16.mxu0 0
    %806 = vmatmul.mubr.bf16.gmra.mrb[0].mxu0 %v658
    %v807 = vpop.f32.mrb[0].mxu0
    %v808 = vadd.f32 %v630, %v807
    %v809 = vpop.f32.mrb[0].mxu0
    %v810 = vpop.f32.mrb[0].mxu0
    %v811 = vadd.f32 %v630, %v810
    %v812 = vpop.f32.mrb[0].mxu0
    %813 = vmatprep.mubr.bf16.mxu0 0
    %814 = vmatmul.mubr.bf16.gmra.mrb[0].mxu0 %v661
    %v815 = vpop.f32.mrb[0].mxu0
    %v816 = vadd.f32 %v630, %v815
    %v817 = vpop.f32.mrb[0].mxu0
    %v818 = vpop.f32.mrb[0].mxu0
    %v819 = vadd.f32 %v630, %v818
    %v820 = vpop.f32.mrb[0].mxu0
    %821 = vmatprep.mubr.bf16.mxu0 0
    %822 = vmatmul.mubr.bf16.gmra.mrb[0].mxu0 %v664
    %v823 = vpop.f32.mrb[0].mxu0
    %v824 = vadd.f32 %v630, %v823
    %v825 = vpop.f32.mrb[0].mxu0
    %v826 = vpop.f32.mrb[0].mxu0
    %v827 = vadd.f32 %v630, %v826
    %v828 = vpop.f32.mrb[0].mxu0
    %829 = vmatprep.mubr.bf16.mxu0 0
    %830 = vmatmul.mubr.bf16.gmra.mrb[0].mxu0 %v667
    %v831 = vpop.f32.mrb[0].mxu0
    %v832 = vadd.f32 %v630, %v831
    %v833 = vpop.f32.mrb[0].mxu0
    %v834 = vpop.f32.mrb[0].mxu0
    %v835 = vadd.f32 %v630, %v834
    %v836 = vpop.f32.mrb[0].mxu0
    %837 = vmatprep.mubr.bf16.mxu0 0
    %838 = vmatmul.mubr.bf16.gmra.mrb[0].mxu0 %v670
    %v839 = vpop.f32.mrb[0].mxu0
    %v840 = vadd.f32 %v630, %v839
    %v841 = vpop.f32.mrb[0].mxu0
    %v842 = vpop.f32.mrb[0].mxu0
    %v843 = vadd.f32 %v630, %v842
    %v844 = vpop.f32.mrb[0].mxu0
    %845 = vmatprep.mubr.bf16.mxu0 0
    %846 = vmatmul.mubr.bf16.gmra.mrb[0].mxu0 %v673
    %v847 = vpop.f32.mrb[0].mxu0
    %v848 = vadd.f32 %v630, %v847
    %v849 = vpop.f32.mrb[0].mxu0
    %v850 = vpop.f32.mrb[0].mxu0
    %v851 = vadd.f32 %v630, %v850
    %v852 = vpop.f32.mrb[0].mxu0
    %853 = vmatprep.mubr.bf16.mxu0 0
    %854 = vmatmul.mubr.bf16.gmra.mrb[0].mxu0 %v676
    %v855 = vpop.f32.mrb[0].mxu0
    %v856 = vadd.f32 %v630, %v855
    %v857 = vpop.f32.mrb[0].mxu0
    %v858 = vpop.f32.mrb[0].mxu0
    %v859 = vadd.f32 %v630, %v858
    %v860 = vpop.f32.mrb[0].mxu0
    %861 = vmatprep.mubr.bf16.mxu0 0
    %862 = vmatmul.mubr.bf16.gmra.mrb[0].mxu0 %v679
    %v863 = vpop.f32.mrb[0].mxu0
    %v864 = vadd.f32 %v630, %v863
    %v865 = vpop.f32.mrb[0].mxu0
    %v866 = vpop.f32.mrb[0].mxu0
    %v867 = vadd.f32 %v630, %v866
    %v868 = vpop.f32.mrb[0].mxu0
    %869 = vmatprep.mubr.bf16.mxu0 0
    %870 = vmatmul.mubr.bf16.gmra.mrb[0].mxu0 %v682
    %v871 = vpop.f32.mrb[0].mxu0
    %v872 = vadd.f32 %v630, %v871
    %v873 = vpop.f32.mrb[0].mxu0
    %v874 = vpop.f32.mrb[0].mxu0
    %v875 = vadd.f32 %v630, %v874
    %v876 = vpop.f32.mrb[0].mxu0
    %877 = vmatprep.mubr.bf16.mxu0 0
    %878 = vmatmul.mubr.bf16.gmra.mrb[0].mxu0 %v685
    %v879 = vpop.f32.mrb[0].mxu0
    %v880 = vadd.f32 %v630, %v879
    %v881 = vpop.f32.mrb[0].mxu0
    %v882 = vpop.f32.mrb[0].mxu0
    %v883 = vadd.f32 %v630, %v882
    %v884 = vpop.f32.mrb[0].mxu0
    %885 = vmatprep.mubr.bf16.mxu0 0
    %886 = vmatmul.mubr.bf16.gmra.mrb[0].mxu0 %v688
    %v887 = vpop.f32.mrb[0].mxu0
    %v888 = vadd.f32 %v630, %v887
    %v889 = vpop.f32.mrb[0].mxu0
    %v890 = vpop.f32.mrb[0].mxu0
    %v891 = vadd.f32 %v630, %v890
    %v892 = vpop.f32.mrb[0].mxu0
    %893 = vmatprep.mubr.bf16.mxu0 0
    %894 = vmatmul.mubr.bf16.gmra.mrb[0].mxu0 %v691
    %v895 = vpop.f32.mrb[0].mxu0
    %v896 = vadd.f32 %v630, %v895
    %v897 = vpop.f32.mrb[0].mxu0
    %v898 = vpop.f32.mrb[0].mxu0
    %v899 = vadd.f32 %v630, %v898
    %v900 = vpop.f32.mrb[0].mxu0
    %901 = vmatprep.mubr.bf16.mxu0 0
    %902 = vmatmul.mubr.bf16.gmra.mrb[0].mxu0 %v694
    %v903 = vpop.f32.mrb[0].mxu0
    %v904 = vadd.f32 %v630, %v903
    %v905 = vpop.f32.mrb[0].mxu0
    %v906 = vpop.f32.mrb[0].mxu0
    %v907 = vadd.f32 %v630, %v906
    %v908 = vpop.f32.mrb[0].mxu0
    %909 = vmatprep.mubr.bf16.mxu0 0
    %910 = vmatmul.mubr.bf16.gmra.mrb[0].mxu0 %v697
    %v911 = vpop.f32.mrb[0].mxu0
    %v912 = vadd.f32 %v630, %v911
    %v913 = vpop.f32.mrb[0].mxu0
    %v914 = vpop.f32.mrb[0].mxu0
    %v915 = vadd.f32 %v630, %v914
    %v916 = vpop.f32.mrb[0].mxu0
    %917 = vmatprep.mubr.bf16.mxu0 0
    %918 = vmatmul.mubr.bf16.gmra.mrb[0].mxu0 %v700
    %v919 = vpop.f32.mrb[0].mxu0
    %v920 = vadd.f32 %v630, %v919
    %v921 = vpop.f32.mrb[0].mxu0
    %v922 = vpop.f32.mrb[0].mxu0
    %v923 = vadd.f32 %v630, %v922
    %v924 = vpop.f32.mrb[0].mxu0
    %925 = vmatprep.mubr.bf16.mxu0 0
    %926 = vmatmul.mubr.bf16.gmra.mrb[0].mxu0 %v703
    %v927 = vpop.f32.mrb[0].mxu0
    %v928 = vadd.f32 %v630, %v927
    %v929 = vpop.f32.mrb[0].mxu0
    %v930 = vpop.f32.mrb[0].mxu0
    %v931 = vadd.f32 %v630, %v930
    %v932 = vpop.f32.mrb[0].mxu0
    %933 = vmatprep.mubr.bf16.mxu0 0
    %934 = vmatmul.mubr.bf16.gmra.mrb[0].mxu0 %v706
    %v935 = vpop.f32.mrb[0].mxu0
    %v936 = vadd.f32 %v630, %v935
    %v937 = vpop.f32.mrb[0].mxu0
    %v938 = vpop.f32.mrb[0].mxu0
    %v939 = vadd.f32 %v630, %v938
    %v940 = vpop.f32.mrb[0].mxu0
    %941 = vmatprep.mubr.bf16.mxu0 0
    %942 = vmatmul.mubr.bf16.gmra.mrb[0].mxu0 %v709
    %v943 = vpop.f32.mrb[0].mxu0
    %v944 = vadd.f32 %v630, %v943
    %v945 = vpop.f32.mrb[0].mxu0
    %v946 = vpop.f32.mrb[0].mxu0
    %v947 = vadd.f32 %v630, %v946
    %v948 = vpop.f32.mrb[0].mxu0
    %949 = vmatprep.mubr.bf16.mxu0 0
    %950 = vmatmul.mubr.bf16.gmra.mrb[0].mxu0 %v712
    %v951 = vpop.f32.mrb[0].mxu0
    %v952 = vadd.f32 %v630, %v951
    %v953 = vpop.f32.mrb[0].mxu0
    %v954 = vpop.f32.mrb[0].mxu0
    %v955 = vadd.f32 %v630, %v954
    %v956 = vpop.f32.mrb[0].mxu0
    %957 = vmatprep.mubr.bf16.mxu0 0
    %958 = vmatmul.mubr.bf16.gmra.mrb[0].mxu0 %v715
    %v959 = vpop.f32.mrb[0].mxu0
    %v960 = vadd.f32 %v630, %v959
    %v961 = vpop.f32.mrb[0].mxu0
    %v962 = vpop.f32.mrb[0].mxu0
    %v963 = vadd.f32 %v630, %v962
    %v964 = vpop.f32.mrb[0].mxu0
    %965 = vmatprep.mubr.bf16.mxu0 0
    %966 = vmatmul.mubr.bf16.gmra.mrb[0].mxu0 %v718
    %v967 = vpop.f32.mrb[0].mxu0
    %v968 = vadd.f32 %v630, %v967
    %v969 = vpop.f32.mrb[0].mxu0
    %v970 = vpop.f32.mrb[0].mxu0
    %v971 = vadd.f32 %v630, %v970
    %v972 = vpop.f32.mrb[0].mxu0
    %973 = vmatprep.mubr.bf16.mxu0 0
    %974 = vmatmul.mubr.bf16.gmra.mrb[0].mxu0 %v721
    %v975 = vpop.f32.mrb[0].mxu0
    %v976 = vadd.f32 %v630, %v975
    %v977 = vpop.f32.mrb[0].mxu0
    %v978 = vpop.f32.mrb[0].mxu0
    %v979 = vadd.f32 %v630, %v978
    %v980 = vpop.f32.mrb[0].mxu0
    %981 = vmatprep.mubr.bf16.mxu0 0
    %982 = vmatmul.mubr.bf16.gmra.mrb[0].mxu0 %v724
    %v983 = vpop.f32.mrb[0].mxu0
    %v984 = vadd.f32 %v630, %v983
    %v985 = vpop.f32.mrb[0].mxu0
    %v986 = vpop.f32.mrb[0].mxu0
    %v987 = vadd.f32 %v630, %v986
    %v988 = vpop.f32.mrb[0].mxu0
    %989 = vmatprep.mubr.bf16.mxu0 0
    %990 = vmatmul.mubr.bf16.gmra.mrb[0].mxu0 %v727
    %v991 = vpop.f32.mrb[0].mxu0
    %v992 = vadd.f32 %v630, %v991
    %v993 = vpop.f32.mrb[0].mxu0
    %v994 = vpop.f32.mrb[0].mxu0
    %v995 = vadd.f32 %v630, %v994
    %v996 = vpop.f32.mrb[0].mxu0
    %997 = vmatprep.mubr.bf16.mxu0 0
    %998 = vmatmul.mubr.bf16.gmra.mrb[0].mxu0 %v730
    %v999 = vpop.f32.mrb[0].mxu0
    %v1000 = vadd.f32 %v630, %v999
    %v1001 = vpop.f32.mrb[0].mxu0
    %v1002 = vpop.f32.mrb[0].mxu0
    %v1003 = vadd.f32 %v630, %v1002
    %v1004 = vpop.f32.mrb[0].mxu0
    %1005 = vmatprep.mubr.bf16.mxu0 0
    %1006 = vmatmul.mubr.bf16.gmra.mrb[0].mxu0 %v733
    %v1007 = vpop.f32.mrb[0].mxu0
    %v1008 = vadd.f32 %v630, %v1007
    %v1009 = vpop.f32.mrb[0].mxu0
    %v1010 = vpop.f32.mrb[0].mxu0
    %v1011 = vadd.f32 %v630, %v1010
    %v1012 = vpop.f32.mrb[0].mxu0
    %1013 = vmatprep.mubr.bf16.mxu0 0
    %1014 = vmatmul.mubr.bf16.gmra.mrb[0].mxu0 %v736
    %v1015 = vpop.f32.mrb[0].mxu0
    %v1016 = vadd.f32 %v630, %v1015
    %v1017 = vpop.f32.mrb[0].mxu0
    %v1018 = vpop.f32.mrb[0].mxu0
    %v1019 = vadd.f32 %v630, %v1018
    %v1020 = vpop.f32.mrb[0].mxu0
    %1021 = vmatprep.mubr.bf16.mxu0 0
    %1022 = vmatmul.mubr.bf16.gmra.mrb[0].mxu0 %v739
    %v1023 = vpop.f32.mrb[0].mxu0
    %v1024 = vadd.f32 %v630, %v1023
    %v1025 = vpop.f32.mrb[0].mxu0
    %v1026 = vpop.f32.mrb[0].mxu0
    %v1027 = vadd.f32 %v630, %v1026
    %v1028 = vpop.f32.mrb[0].mxu0
    %1029 = vdwg.mxu0
    %v1030 = vmax.f32 %v776, 0.0
    %v1031 = vmax.f32 %v779, 0.0
    %v1032 = vmax.f32 %v784, 0.0
    %v1033 = vmax.f32 %v787, 0.0
    %v1034 = vmax.f32 %v792, 0.0
    %v1035 = vmax.f32 %v795, 0.0
    %v1036 = vmax.f32 %v800, 0.0
    %v1037 = vmax.f32 %v803, 0.0
    %v1038 = vmax.f32 %v808, 0.0
    %v1039 = vmax.f32 %v811, 0.0
    %v1040 = vmax.f32 %v816, 0.0
    %v1041 = vmax.f32 %v819, 0.0
    %v1042 = vmax.f32 %v824, 0.0
    %v1043 = vmax.f32 %v827, 0.0
    %v1044 = vmax.f32 %v832, 0.0
    %v1045 = vmax.f32 %v835, 0.0
    %v1046 = vmax.f32 %v840, 0.0
    %v1047 = vmax.f32 %v843, 0.0
    %v1048 = vmax.f32 %v848, 0.0
    %v1049 = vmax.f32 %v851, 0.0
    %v1050 = vmax.f32 %v856, 0.0
    %v1051 = vmax.f32 %v859, 0.0
    %v1052 = vmax.f32 %v864, 0.0
    %v1053 = vmax.f32 %v867, 0.0
    %v1054 = vmax.f32 %v872, 0.0
    %v1055 = vmax.f32 %v875, 0.0
    %v1056 = vmax.f32 %v880, 0.0
    %v1057 = vmax.f32 %v883, 0.0
    %v1058 = vmax.f32 %v888, 0.0
    %v1059 = vmax.f32 %v891, 0.0
    %v1060 = vmax.f32 %v896, 0.0
    %v1061 = vmax.f32 %v899, 0.0
    %v1062 = vmax.f32 %v904, 0.0
    %v1063 = vmax.f32 %v907, 0.0
    %v1064 = vmax.f32 %v912, 0.0
    %v1065 = vmax.f32 %v915, 0.0
    %v1066 = vmax.f32 %v920, 0.0
    %v1067 = vmax.f32 %v923, 0.0
    %v1068 = vmax.f32 %v928, 0.0
    %v1069 = vmax.f32 %v931, 0.0
    %v1070 = vmax.f32 %v936, 0.0
    %v1071 = vmax.f32 %v939, 0.0
    %v1072 = vmax.f32 %v944, 0.0
    %v1073 = vmax.f32 %v947, 0.0
    %v1074 = vmax.f32 %v952, 0.0
    %v1075 = vmax.f32 %v955, 0.0
    %v1076 = vmax.f32 %v960, 0.0
    %v1077 = vmax.f32 %v963, 0.0
    %v1078 = vmax.f32 %v968, 0.0
    %v1079 = vmax.f32 %v971, 0.0
    %v1080 = vmax.f32 %v976, 0.0
    %v1081 = vmax.f32 %v979, 0.0
    %v1082 = vmax.f32 %v984, 0.0
    %v1083 = vmax.f32 %v987, 0.0
    %v1084 = vmax.f32 %v992, 0.0
    %v1085 = vmax.f32 %v995, 0.0
    %v1086 = vmax.f32 %v1000, 0.0
    %v1087 = vmax.f32 %v1003, 0.0
    %v1088 = vmax.f32 %v1008, 0.0
    %v1089 = vmax.f32 %v1011, 0.0
    %v1090 = vmax.f32 %v1016, 0.0
    %v1091 = vmax.f32 %v1019, 0.0
    %v1092 = vmax.f32 %v1024, 0.0
    %v1093 = vmax.f32 %v1027, 0.0
    %v1094 = vld [vmem:[%s5] sm:$0x1]
    %v1095 = vpack.c.bf16 %v1031, %v1030
    %v1096 = vpack.c.bf16 %v1033, %v1032
    %v1097 = vpack.c.bf16 %v1035, %v1034
    %v1098 = vpack.c.bf16 %v1037, %v1036
    %v1099 = vpack.c.bf16 %v1039, %v1038
    %v1100 = vpack.c.bf16 %v1041, %v1040
    %v1101 = vpack.c.bf16 %v1043, %v1042
    %v1102 = vpack.c.bf16 %v1045, %v1044
    %v1103 = vpack.c.bf16 %v1047, %v1046
    %v1104 = vpack.c.bf16 %v1049, %v1048
    %v1105 = vpack.c.bf16 %v1051, %v1050
    %v1106 = vpack.c.bf16 %v1053, %v1052
    %v1107 = vpack.c.bf16 %v1055, %v1054
    %v1108 = vpack.c.bf16 %v1057, %v1056
    %v1109 = vpack.c.bf16 %v1059, %v1058
    %v1110 = vpack.c.bf16 %v1061, %v1060
    %v1111 = vpack.c.bf16 %v1063, %v1062
    %v1112 = vpack.c.bf16 %v1065, %v1064
    %v1113 = vpack.c.bf16 %v1067, %v1066
    %v1114 = vpack.c.bf16 %v1069, %v1068
    %v1115 = vpack.c.bf16 %v1071, %v1070
    %v1116 = vpack.c.bf16 %v1073, %v1072
    %v1117 = vpack.c.bf16 %v1075, %v1074
    %v1118 = vpack.c.bf16 %v1077, %v1076
    %v1119 = vpack.c.bf16 %v1079, %v1078
    %v1120 = vpack.c.bf16 %v1081, %v1080
    %v1121 = vpack.c.bf16 %v1083, %v1082
    %v1122 = vpack.c.bf16 %v1085, %v1084
    %v1123 = vpack.c.bf16 %v1087, %v1086
    %v1124 = vpack.c.bf16 %v1089, %v1088
    %v1125 = vpack.c.bf16 %v1091, %v1090
    %v1126 = vpack.c.bf16 %v1093, %v1092
    %v1127 = vld [vmem:[%s6] sm:$0x3]
    %1129 = vset.pattern.permute.xlu0 0
    %1130 = vperm.xlu0 %1129, %v1127
    %v1131 = vpop.permute.xlu0 %1130
    %v1134 = vsel %vm644, %v1094, 0
    %v1137 = vsel %vm644, %v1095, 0
    %v1140 = vsel %vm644, %v1096, 0
    %v1143 = vsel %vm644, %v1097, 0
    %v1146 = vsel %vm644, %v1098, 0
    %v1149 = vsel %vm644, %v1099, 0
    %v1152 = vsel %vm644, %v1100, 0
    %v1155 = vsel %vm644, %v1101, 0
    %v1158 = vsel %vm644, %v1102, 0
    %v1161 = vsel %vm644, %v1103, 0
    %v1164 = vsel %vm644, %v1104, 0
    %v1167 = vsel %vm644, %v1105, 0
    %v1170 = vsel %vm644, %v1106, 0
    %v1173 = vsel %vm644, %v1107, 0
    %v1176 = vsel %vm644, %v1108, 0
    %v1179 = vsel %vm644, %v1109, 0
    %v1182 = vsel %vm644, %v1110, 0
    %v1185 = vsel %vm644, %v1111, 0
    %v1188 = vsel %vm644, %v1112, 0
    %v1191 = vsel %vm644, %v1113, 0
    %v1194 = vsel %vm644, %v1114, 0
    %v1197 = vsel %vm644, %v1115, 0
    %v1200 = vsel %vm644, %v1116, 0
    %v1203 = vsel %vm644, %v1117, 0
    %v1206 = vsel %vm644, %v1118, 0
    %v1209 = vsel %vm644, %v1119, 0
    %v1212 = vsel %vm644, %v1120, 0
    %v1215 = vsel %vm644, %v1121, 0
    %v1218 = vsel %vm644, %v1122, 0
    %v1221 = vsel %vm644, %v1123, 0
    %v1224 = vsel %vm644, %v1124, 0
    %v1227 = vsel %vm644, %v1125, 0
    %v1230 = vsel %vm644, %v1126, 0
    %1232 = vmatprep.subr.bf16.mxu0 0
    %1233 = vmatpush1.bf16.xpose.msra.mxu0 %v1137
    %1234 = vmatprep.subr.bf16.mxu0 0
    %1235 = vmatpush1.bf16.xpose.msra.mxu0 %v1140
    %1236 = vmatprep.subr.bf16.mxu0 0
    %1237 = vmatpush1.bf16.xpose.msra.mxu0 %v1143
    %1238 = vmatprep.subr.bf16.mxu0 0
    %1239 = vmatpush1.bf16.xpose.msra.mxu0 %v1146
    %1240 = vmatprep.subr.bf16.mxu0 0
    %1241 = vmatpush1.bf16.xpose.msra.mxu0 %v1149
    %1242 = vmatprep.subr.bf16.mxu0 0
    %1243 = vmatpush1.bf16.xpose.msra.mxu0 %v1152
    %1244 = vmatprep.subr.bf16.mxu0 0
    %1245 = vmatpush1.bf16.xpose.msra.mxu0 %v1155
    %1246 = vmatprep.subr.bf16.mxu0 0
    %1247 = vmatpush1.bf16.xpose.msra.mxu0 %v1158
    %1248 = vmatprep.subr.bf16.mxu0 0
    %1249 = vmatpush1.bf16.xpose.msra.mxu0 %v1161
    %1250 = vmatprep.subr.bf16.mxu0 0
    %1251 = vmatpush1.bf16.xpose.msra.mxu0 %v1164
    %1252 = vmatprep.subr.bf16.mxu0 0
    %1253 = vmatpush1.bf16.xpose.msra.mxu0 %v1167
    %1254 = vmatprep.subr.bf16.mxu0 0
    %1255 = vmatpush1.bf16.xpose.msra.mxu0 %v1170
    %1256 = vmatprep.subr.bf16.mxu0 0
    %1257 = vmatpush1.bf16.xpose.msra.mxu0 %v1173
    %1258 = vmatprep.subr.bf16.mxu0 0
    %1259 = vmatpush1.bf16.xpose.msra.mxu0 %v1176
    %1260 = vmatprep.subr.bf16.mxu0 0
    %1261 = vmatpush1.bf16.xpose.msra.mxu0 %v1179
    %1262 = vmatprep.subr.bf16.mxu0 0
    %1263 = vmatpush1.bf16.xpose.msra.mxu0 %v1182
    %1264 = vmatprep.mubr.bf16.mxu0 0
    %1265 = vmatmul.mubr.bf16.gmra.mrb[0].mxu0 %v1134
    %v1266 = vpop.f32.mrb[0].mxu0
    %v1267 = vadd.f32 %v1131, %v1266
    %v1268 = vpop.f32.mrb[0].mxu0
    %v1269 = vadd.f32 %v1131, %v1268
    %v1270 = vpop.f32.mrb[0].mxu0
    %v1271 = vpop.f32.mrb[0].mxu0
    %1272 = vdwg.mxu0
    %1273 = vmatprep.subr.bf16.mxu0 0
    %1274 = vmatpush1.bf16.xpose.msra.mxu0 %v1185
    %1275 = vmatprep.subr.bf16.mxu0 0
    %1276 = vmatpush1.bf16.xpose.msra.mxu0 %v1188
    %1277 = vmatprep.subr.bf16.mxu0 0
    %1278 = vmatpush1.bf16.xpose.msra.mxu0 %v1191
    %1279 = vmatprep.subr.bf16.mxu0 0
    %1280 = vmatpush1.bf16.xpose.msra.mxu0 %v1194
    %1281 = vmatprep.subr.bf16.mxu0 0
    %1282 = vmatpush1.bf16.xpose.msra.mxu0 %v1197
    %1283 = vmatprep.subr.bf16.mxu0 0
    %1284 = vmatpush1.bf16.xpose.msra.mxu0 %v1200
    %1285 = vmatprep.subr.bf16.mxu0 0
    %1286 = vmatpush1.bf16.xpose.msra.mxu0 %v1203
    %1287 = vmatprep.subr.bf16.mxu0 0
    %1288 = vmatpush1.bf16.xpose.msra.mxu0 %v1206
    %1289 = vmatprep.subr.bf16.mxu0 0
    %1290 = vmatpush1.bf16.xpose.msra.mxu0 %v1209
    %1291 = vmatprep.subr.bf16.mxu0 0
    %1292 = vmatpush1.bf16.xpose.msra.mxu0 %v1212
    %1293 = vmatprep.subr.bf16.mxu0 0
    %1294 = vmatpush1.bf16.xpose.msra.mxu0 %v1215
    %1295 = vmatprep.subr.bf16.mxu0 0
    %1296 = vmatpush1.bf16.xpose.msra.mxu0 %v1218
    %1297 = vmatprep.subr.bf16.mxu0 0
    %1298 = vmatpush1.bf16.xpose.msra.mxu0 %v1221
    %1299 = vmatprep.subr.bf16.mxu0 0
    %1300 = vmatpush1.bf16.xpose.msra.mxu0 %v1224
    %1301 = vmatprep.subr.bf16.mxu0 0
    %1302 = vmatpush1.bf16.xpose.msra.mxu0 %v1227
    %1303 = vmatprep.subr.bf16.mxu0 0
    %1304 = vmatpush1.bf16.xpose.msra.mxu0 %v1230
    %1305 = vmatprep.mubr.bf16.mxu0 0
    %1306 = vmatmul.mubr.bf16.gmra.mrb[0].mxu0 %v1134
    %v1307 = vpop.f32.mrb[0].mxu0
    %v1308 = vadd.f32 %v1131, %v1307
    %v1309 = vpop.f32.mrb[0].mxu0
    %v1310 = vadd.f32 %v1131, %v1309
    %v1311 = vpop.f32.mrb[0].mxu0
    %v1312 = vpop.f32.mrb[0].mxu0
    %1313 = vdwg.mxu0
    %v1314 = vmul.f32 %v1267, 0.5
    %v1315 = vmul.f32 %v1269, 0.5
    %v1316 = vmul.f32 %v1308, 0.5
    %v1317 = vmul.f32 %v1310, 0.5
    %v1318 = vtanh.pop %v1314
    %v1319 = vtanh.pop %v1315
    %v1320 = vtanh.pop %v1316
    %v1321 = vtanh.pop %v1317
    %v1322 = vmul.f32 %v1318, 0.5
    %v1323 = vmul.f32 %v1319, 0.5
    %v1324 = vmul.f32 %v1320, 0.5
    %v1325 = vmul.f32 %v1321, 0.5
    %v1326 = vadd.f32 %v1322, 0.5
    %v1327 = vadd.f32 %v1323, 0.5
    %v1328 = vadd.f32 %v1324, 0.5
    %v1329 = vadd.f32 %v1325, 0.5
    %v1334 = vcombine.low %v1326, %v1327
    %v1335 = vcombine.low %v1328, %v1329
    %v1337 = vunpack.c.l.s4 1983009808
    %v1338 = vunpack.c.0.s8 %v1337
    %v1339 = vlaneseq
    %v1340 = vshrl.u32 %v1339, 7
    %v1341 = vsub.s32 %v1338, %v1340
    %v1342 = vrot.slane %v1334, %v1341
    %v1344 = vunpack.c.l.s4 1983009808
    %v1345 = vunpack.c.0.s8 %v1344
    %v1346 = vlaneseq
    %v1347 = vshrl.u32 %v1346, 7
    %v1348 = vsub.s32 %v1345, %v1347
    %v1349 = vrot.slane %v1335, %v1348
    %v1350 = vcombine.low %v1342, %v1349
    %1352 = vst [vmem:[#allocation2] sm:$0xff] %v1350
    // Predicated region
    $region30: #{tpu_custom_call.1} parent=1 // pred_check
      _
    $region31: #{tpu_custom_call.1} parent=1 // pred_check_branch
      %1354 = sbr.rel (0) target = $region33
    $region32: #{tpu_custom_call.1} parent=1 // pred_region
      %s1356 = ssub.s32 128, 128
      %1357 = vsyncadd [#allocation3], %s1356
      %s1359 = sshll.u32 [#allocation2], 4
      %s1360 = int_to_ptr.vmem [resolvable:$true] %s1359
      %1362 = dma.vmem_to_hbm [thread:$0]  %s1360, 128, %s7, [#allocation3]
    $region33: #{tpu_custom_call.1} parent=1 // pred_fallthru
      _
    // Predicated region
    $region34: #{tpu_custom_call.1} parent=1 // pred_check
      _
    $region35: #{tpu_custom_call.1} parent=1 // pred_check_branch
      %1364 = sbr.rel (0) target = $region37
    $region36: #{tpu_custom_call.1} parent=1 // pred_region
      %1365 = dma.done [#allocation3], 128
    $region37: #{tpu_custom_call.1} parent=1 // pred_fallthru
      _
    %1366 = vsyncpa [#allocation3], 1

</llo_original>
